<compile_context>
chip_gen: v7x
topology: tpu7x:2x2x1
jax: 0.10.0
libtpu: 0.0.40
codegen_flags: <defaults>
</compile_context>

<pallas_src>
import functools

import jax
import jax.numpy as jnp
from jax.experimental import pallas as pl
from jax.experimental.pallas import tpu as pltpu

EPS = 1e-5


def _round_up(a, b):
    return (a + b - 1) // b * b


def _layernorm(y, gamma, beta):
    """LayerNorm over the channel (sublane) axis, two-pass statistics.

    y: (C, W) float32; gamma/beta: (C, 1).  Biased variance (PyTorch semantics).
    """
    c = y.shape[0]
    mu = jnp.sum(y, axis=0, keepdims=True) * (1.0 / c)
    d = y - mu
    var = jnp.sum(d * d, axis=0, keepdims=True) * (1.0 / c)
    return d * jax.lax.rsqrt(var + EPS) * gamma + beta


def emb_kernel(x_ref, m_ref, v_ref,
               w1_ref, g1_ref, be1_ref,
               w2_ref, b2_ref, g2_ref, be2_ref,
               o_ref, *, tile_t, ksize, mm_dtype):
    P = ksize // 2
    xcat = x_ref[0, 0]          # (K*Cin+1, W) pre-framed conv1 taps + ones row (bias)
    m = m_ref[0, 0]             # (1, W) mask over the extended window, 0 outside [0, T)
    valid = v_ref[0]            # (1, W) 1 inside [0, T), 0 in halo / T-padding columns

    # ---- block 1: conv1 (+bias via ones row) as one MXU matmul -> mask -> LN -> ReLU
    #      then zero halo columns outside [0, T) so conv2 sees PyTorch's zero padding.
    y1 = jnp.dot(w1_ref[...], xcat, preferred_element_type=jnp.float32) * m
    h1 = jnp.maximum(_layernorm(y1, g1_ref[...], be1_ref[...]), 0.0) * valid   # (E, W)

    # ---- block 2: conv2 as K accumulating MXU dots on shifted h1 views (no concat
    #      temps), then mask -> LN -> ReLU.
    h1m = h1.astype(mm_dtype)
    y2 = jnp.dot(w2_ref[0], h1m[:, 0:tile_t],
                 preferred_element_type=jnp.float32) + b2_ref[...]
    for k in range(1, ksize):
        y2 = y2 + jnp.dot(w2_ref[k], h1m[:, k:k + tile_t],
                          preferred_element_type=jnp.float32)
    y2 = y2 * m[:, P:P + tile_t]
    h2 = jnp.maximum(_layernorm(y2, g2_ref[...], be2_ref[...]), 0.0)

    o_ref[0] = h2.astype(o_ref.dtype)       # lane-dense (E, tile_t) store


# ----------------------------- parameter packing -----------------------------

def pack_conv1_params(w_oik, bias):
    """PyTorch conv1 weight (E, Cin, K) + bias (E,) -> fused (E, K*Cin + 1).

    Tap-major fused layout; the conv bias is folded in as the last column (it multiplies
    the framed ones row on the MXU, so the per-step bias broadcast-add disappears)."""
    o, i, k = w_oik.shape
    w = jnp.transpose(w_oik, (0, 2, 1)).reshape(o, k * i)
    return jnp.concatenate([w, bias.reshape(o, 1)], axis=1)


def pack_conv2_weight(w_oik):
    """PyTorch conv2 weight (E, E, K) -> tap-major planes (K, E, E)."""
    return jnp.transpose(w_oik, (2, 0, 1))


# ----------------------------- wrapper-side framing -----------------------------

def _frame_conv1_taps(x, *, tile, n_tiles, ksize):
    """(B, Cin, T) -> (B, n_tiles, K*Cin + 1, tile + 2P).

    Row (k*Cin + i), lane j of tile t holds x[i, t*tile - 2P + j + k] (zero outside
    [0, T)), i.e. the conv1 taps pre-concatenated over the extended window needed by
    the chained conv2.  The trailing row is all ones (folded conv1 bias).  Built with
    one pad + one gather, so the XLA graph does not grow with n_tiles."""
    B, C, T = x.shape
    P = ksize // 2
    W = tile + 2 * P
    T_pad = tile * n_tiles
    xp = jnp.pad(x, ((0, 0), (0, 0), (2 * P, (T_pad - T) + 2 * P)))
    idx = (jnp.arange(n_tiles)[:, None, None] * tile
           + jnp.arange(ksize)[None, :, None]
           + jnp.arange(W)[None, None, :])                         # (nT, K, W)
    g = jnp.take(xp, idx, axis=2)                                  # (B, C, nT, K, W)
    g = jnp.transpose(g, (0, 2, 3, 1, 4)).reshape(B, n_tiles, ksize * C, W)
    ones = jnp.ones((B, n_tiles, 1, W), x.dtype)
    return jnp.concatenate([g, ones], axis=2)


def _frame_mask(mask_f, *, tile, n_tiles, ksize):
    """(B, 1, T) float -> (B, n_tiles, 1, tile + 2P); zero outside [0, T)."""
    B, _, T = mask_f.shape
    P = ksize // 2
    W = tile + 2 * P
    T_pad = tile * n_tiles
    mp = jnp.pad(mask_f, ((0, 0), (0, 0), (P, (T_pad - T) + P)))
    idx = jnp.arange(n_tiles)[:, None] * tile + jnp.arange(W)[None, :]   # (nT, W)
    g = jnp.take(mp, idx, axis=2)                                        # (B, 1, nT, W)
    return jnp.transpose(g, (0, 2, 1, 3))


def _frame_valid(T, n_tiles, tile, ksize, dtype):
    """(n_tiles, 1, tile + 2P): 1 where the extended-window position lies in [0, T)."""
    P = ksize // 2
    W = tile + 2 * P
    pos = jnp.arange(n_tiles)[:, None] * tile - P + jnp.arange(W)[None, :]
    return ((pos >= 0) & (pos < T)).astype(dtype).reshape(n_tiles, 1, W)


# ----------------------------- public entry point -----------------------------

@functools.partial(jax.jit, static_argnames=("tile_t", "mm_dtype", "out_dtype"))
def embedding_module(x_nct, mask_b1t, params, *, tile_t=None, mm_dtype=jnp.float32,
                     out_dtype=None):
    """Forward pass matching EmbeddingModule.forward.

    x_nct:    (B, C_in, T) float32  (PyTorch NCT layout, kept end-to-end)
    mask_b1t: (B, 1, T) bool
    params:   "w1" (E, K*Cin+1) from pack_conv1_params, "w2" (K, E, E) from
              pack_conv2_weight, "b2"/"g1"/"be1"/"g2"/"be2" as (E, 1) float32
    mm_dtype: dtype of the matmul operands (jnp.bfloat16 recommended on v6e/v7x;
              LayerNorm math always stays float32)
    returns:  ((B, E, T), (B, 1, T) bool)
    """
    B, Cin, T = x_nct.shape
    E, kc1 = params["w1"].shape
    K = params["w2"].shape[0]
    P = K // 2
    assert K % 2 == 1 and kc1 == K * Cin + 1
    dt = x_nct.dtype
    out_dtype = dt if out_dtype is None else out_dtype

    # T tiling: multiple of 128 (lane-dense output stores), large by default (per grid
    # step overhead ~0.35 us), and pad T up to a tile multiple instead of ever falling
    # back to one full-length tile (v7x VMEM safety).
    if tile_t is None:
        tile_t = 1024
    tile_t = _round_up(max(128, min(tile_t, _round_up(T, 128))), 128)
    T_pad = _round_up(T, tile_t)
    n_t = T_pad // tile_t
    W = tile_t + 2 * P

    mask_f = mask_b1t.astype(dt)
    x_fr = _frame_conv1_taps(x_nct, tile=tile_t, n_tiles=n_t, ksize=K).astype(mm_dtype)
    m_fr = _frame_mask(mask_f, tile=tile_t, n_tiles=n_t, ksize=K)
    v_fr = _frame_valid(T, n_t, tile_t, K, jnp.float32)

    # Weights cast once here (not per grid step inside the kernel).
    w1 = params["w1"].astype(mm_dtype)
    w2 = params["w2"].astype(mm_dtype)

    kern = functools.partial(emb_kernel, tile_t=tile_t, ksize=K, mm_dtype=mm_dtype)

    cost = pl.CostEstimate(
        flops=int(2 * B * T_pad * E * (K * Cin + 1 + K * E)),
        transcendentals=int(2 * B * T_pad),
        bytes_accessed=int(x_fr.size * x_fr.dtype.itemsize
                           + m_fr.size * m_fr.dtype.itemsize
                           + v_fr.size * v_fr.dtype.itemsize
                           + (w1.size + w2.size) * w1.dtype.itemsize
                           + B * E * T_pad * jnp.dtype(out_dtype).itemsize))

    out = pl.pallas_call(
        kern,
        out_shape=jax.ShapeDtypeStruct((B, E, T_pad), out_dtype),
        grid=(B, n_t),
        in_specs=[
            pl.BlockSpec((1, 1, K * Cin + 1, W), lambda b, t: (b, t, 0, 0)),  # x taps+1s
            pl.BlockSpec((1, 1, 1, W),           lambda b, t: (b, t, 0, 0)),  # mask
            pl.BlockSpec((1, 1, W),              lambda b, t: (t, 0, 0)),     # valid row
            pl.BlockSpec((E, K * Cin + 1),       lambda b, t: (0, 0)),        # w1 (+bias)
            pl.BlockSpec((E, 1),                 lambda b, t: (0, 0)),        # ln1 gamma
            pl.BlockSpec((E, 1),                 lambda b, t: (0, 0)),        # ln1 beta
            pl.BlockSpec((K, E, E),              lambda b, t: (0, 0, 0)),     # w2 taps
            pl.BlockSpec((E, 1),                 lambda b, t: (0, 0)),        # conv2 bias
            pl.BlockSpec((E, 1),                 lambda b, t: (0, 0)),        # ln2 gamma
            pl.BlockSpec((E, 1),                 lambda b, t: (0, 0)),        # ln2 beta
        ],
        out_specs=pl.BlockSpec((1, E, tile_t), lambda b, t: (b, 0, t)),
        compiler_params=pltpu.CompilerParams(
            dimension_semantics=("parallel", "parallel")),
        cost_estimate=cost,
    )(x_fr, m_fr, v_fr,
      w1, params["g1"], params["be1"],
      w2, params["b2"], params["g2"], params["be2"])

    if T_pad != T:
        out = out[:, :, :T]
    return out, mask_b1t.astype(bool)


# ----------------------------- pure-JAX reference -----------------------------

def _ln_ref(h, g, b):
    mu = h.mean(axis=1, keepdims=True)
    var = ((h - mu) ** 2).mean(axis=1, keepdims=True)
    return (h - mu) * jax.lax.rsqrt(var + EPS) * g.reshape(1, -1, 1) \
        + b.reshape(1, -1, 1)


def reference(x_nct, mask_b1t, pt):
    """Mirrors EmbeddingModule.forward exactly (PyTorch-layout (O, I, K) weights)."""
    m = mask_b1t.astype(x_nct.dtype)
    K = pt["w1"].shape[-1]
    P = K // 2

    def conv(h, w_oik, bias):
        y = jax.lax.conv_general_dilated(
            h, w_oik, window_strides=(1,), padding=[(P, P)],
            dimension_numbers=("NCH", "OIH", "NCH"))
        return y + bias.reshape(1, -1, 1)

    h = conv(x_nct, pt["w1"], pt["b1"]) * m
    h = jnp.maximum(_ln_ref(h, pt["g1"], pt["be1"]), 0.0)
    h = conv(h, pt["w2"], pt["b2"]) * m
    h = jnp.maximum(_ln_ref(h, pt["g2"], pt["be2"]), 0.0)
    return h


if __name__ == "__main__":
    B, Cin, E, K = 2, 8, 32, 3

    key = jax.random.PRNGKey(0)
    ks = jax.random.split(key, 8)

    # PyTorch-layout parameters (Conv1d weight is (out, in, K)); conv bias = 0 as in the
    # module's nn.init.constant_.
    w1_oik = 0.1 * jax.random.normal(ks[0], (E, Cin, K), jnp.float32)
    w2_oik = 0.1 * jax.random.normal(ks[1], (E, E, K), jnp.float32)
    b1 = jnp.zeros((E,), jnp.float32)
    b2 = jnp.zeros((E,), jnp.float32)
    g1 = 1.0 + 0.1 * jax.random.normal(ks[2], (E,), jnp.float32)
    be1 = 0.1 * jax.random.normal(ks[3], (E,), jnp.float32)
    g2 = 1.0 + 0.1 * jax.random.normal(ks[4], (E,), jnp.float32)
    be2 = 0.1 * jax.random.normal(ks[5], (E,), jnp.float32)

    params = {
        "w1": pack_conv1_params(w1_oik, b1),
        "w2": pack_conv2_weight(w2_oik),
        "b2": b2.reshape(E, 1),
        "g1": g1.reshape(E, 1), "be1": be1.reshape(E, 1),
        "g2": g2.reshape(E, 1), "be2": be2.reshape(E, 1),
    }
    pt = {"w1": w1_oik, "b1": b1, "g1": g1, "be1": be1,
          "w2": w2_oik, "b2": b2, "g2": g2, "be2": be2}

    # ---- case 1: T a multiple of 128, default (single) tile, f32 matmuls
    T = 256
    x = jax.random.normal(ks[6], (B, Cin, T), jnp.float32)
    lengths = jnp.array([T, T - 37])
    mask = jnp.arange(T)[None, None, :] < lengths[:, None, None]     # (B, 1, T) bool

    out, mask_out = embedding_module(x, mask, params)
    out = jax.block_until_ready(out)
    ref = reference(x, mask, pt)
    assert out.shape == (B, E, T)
    assert mask_out.dtype == jnp.bool_ and mask_out.shape == (B, 1, T)
    err1 = float(jnp.max(jnp.abs(out - ref)))
    assert err1 < 5e-4, f"f32 case1 max err {err1}"

    # ---- case 2: ragged T (padded up to a tile multiple), two T-tiles, f32 matmuls
    T2 = 200
    x2 = jax.random.normal(ks[7], (B, Cin, T2), jnp.float32)
    lengths2 = jnp.array([T2, T2 - 61])
    mask2 = jnp.arange(T2)[None, None, :] < lengths2[:, None, None]
    out2, _ = embedding_module(x2, mask2, params, tile_t=128)
    out2 = jax.block_until_ready(out2)
    ref2 = reference(x2, mask2, pt)
    err2 = float(jnp.max(jnp.abs(out2 - ref2)))
    assert out2.shape == (B, E, T2)
    assert err2 < 5e-4, f"f32 case2 max err {err2}"

    # ---- case 3: bf16 matmul operands (v6e/v7x MXU-native) — smoke / loose check only
    out_bf, _ = embedding_module(x, mask, params, mm_dtype=jnp.bfloat16)
    out_bf = jax.block_until_ready(out_bf)
    assert bool(jnp.all(jnp.isfinite(out_bf)))
    assert float(jnp.mean(jnp.abs(out_bf - ref))) < 5e-2

    print("KERNEL_OK")
</pallas_src>

<mosaic_0001>
module attributes {stable_mosaic.version = 11 : i64} {
  func.func @emb_kernel(%arg0: i32, %arg1: i32, %arg2: memref<1x1x25x258xf32, #tpu.memory_space<vmem>>, %arg3: memref<1x1x1x258xf32, #tpu.memory_space<vmem>>, %arg4: memref<1x1x258xf32, #tpu.memory_space<vmem>>, %arg5: memref<32x25xf32, #tpu.memory_space<vmem>>, %arg6: memref<32x1xf32, #tpu.memory_space<vmem>>, %arg7: memref<32x1xf32, #tpu.memory_space<vmem>>, %arg8: memref<3x32x32xf32, #tpu.memory_space<vmem>>, %arg9: memref<32x1xf32, #tpu.memory_space<vmem>>, %arg10: memref<32x1xf32, #tpu.memory_space<vmem>>, %arg11: memref<32x1xf32, #tpu.memory_space<vmem>>, %arg12: memref<1x32x256xf32, #tpu.memory_space<vmem>>) attributes {dimension_semantics = [#tpu.dimension_semantics<parallel>, #tpu.dimension_semantics<parallel>], iteration_bounds = array<i64: 2, 1>, scalar_prefetch = 0 : i64, scratch_operands = 0 : i64, tpu.core_type = #tpu.core_type<tc>, window_params = [{transform_indices = @transform_0, window_bounds = array<i64: 1, 1, 25, 258>}, {transform_indices = @transform_1, window_bounds = array<i64: 1, 1, 1, 258>}, {transform_indices = @transform_2, window_bounds = array<i64: 1, 1, 258>}, {pipeline_mode = #tpu.pipeline_mode<synchronous>, transform_indices = @transform_3, window_bounds = array<i64: 32, 25>}, {pipeline_mode = #tpu.pipeline_mode<synchronous>, transform_indices = @transform_4, window_bounds = array<i64: 32, 1>}, {pipeline_mode = #tpu.pipeline_mode<synchronous>, transform_indices = @transform_5, window_bounds = array<i64: 32, 1>}, {pipeline_mode = #tpu.pipeline_mode<synchronous>, transform_indices = @transform_6, window_bounds = array<i64: 3, 32, 32>}, {pipeline_mode = #tpu.pipeline_mode<synchronous>, transform_indices = @transform_7, window_bounds = array<i64: 32, 1>}, {pipeline_mode = #tpu.pipeline_mode<synchronous>, transform_indices = @transform_8, window_bounds = array<i64: 32, 1>}, {pipeline_mode = #tpu.pipeline_mode<synchronous>, transform_indices = @transform_9, window_bounds = array<i64: 32, 1>}, {transform_indices = @transform_10, window_bounds = array<i64: 1, 32, 256>}]} {
    %c0 = arith.constant 0 : index
    %c0_0 = arith.constant 0 : index
    %c0_1 = arith.constant 0 : index
    %c0_2 = arith.constant 0 : index
    %0 = vector.load %arg2[%c0, %c0_0, %c0_1, %c0_2] : memref<1x1x25x258xf32, #tpu.memory_space<vmem>>, vector<1x1x25x258xf32>
    %1 = vector.shape_cast %0 : vector<1x1x25x258xf32> to vector<25x258xf32>
    %c0_3 = arith.constant 0 : index
    %c0_4 = arith.constant 0 : index
    %c0_5 = arith.constant 0 : index
    %c0_6 = arith.constant 0 : index
    %2 = vector.load %arg3[%c0_3, %c0_4, %c0_5, %c0_6] : memref<1x1x1x258xf32, #tpu.memory_space<vmem>>, vector<1x1x1x258xf32>
    %3 = vector.shape_cast %2 : vector<1x1x1x258xf32> to vector<1x258xf32>
    %c0_7 = arith.constant 0 : index
    %c0_8 = arith.constant 0 : index
    %c0_9 = arith.constant 0 : index
    %4 = vector.load %arg4[%c0_7, %c0_8, %c0_9] : memref<1x1x258xf32, #tpu.memory_space<vmem>>, vector<1x1x258xf32>
    %5 = vector.shape_cast %4 : vector<1x1x258xf32> to vector<1x258xf32>
    %c0_10 = arith.constant 0 : index
    %c0_11 = arith.constant 0 : index
    %6 = vector.load %arg5[%c0_10, %c0_11] : memref<32x25xf32, #tpu.memory_space<vmem>>, vector<32x25xf32>
    %cst = arith.constant dense<0.000000e+00> : vector<32x258xf32>
    %7 = tpu.matmul %6, %1, %cst {dimension_numbers = #tpu.dot_dimension_numbers<[1], [0], [0], [1], [0, 0, 1, 1], [], []>} : vector<32x25xf32>, vector<25x258xf32>, vector<32x258xf32> -> vector<32x258xf32>
    %8 = vector.broadcast %3 : vector<1x258xf32> to vector<32x258xf32>
    %9 = arith.mulf %7, %8 : vector<32x258xf32>
    %c0_12 = arith.constant 0 : index
    %c0_13 = arith.constant 0 : index
    %10 = vector.load %arg6[%c0_12, %c0_13] : memref<32x1xf32, #tpu.memory_space<vmem>>, vector<32x1xf32>
    %c0_14 = arith.constant 0 : index
    %c0_15 = arith.constant 0 : index
    %11 = vector.load %arg7[%c0_14, %c0_15] : memref<32x1xf32, #tpu.memory_space<vmem>>, vector<32x1xf32>
    %cst_16 = arith.constant dense<0.000000e+00> : vector<258xf32>
    %12 = vector.multi_reduction <add>, %9, %cst_16 [0] : vector<32x258xf32> to vector<258xf32>
    %13 = vector.shape_cast %12 : vector<258xf32> to vector<1x258xf32>
    %cst_17 = arith.constant 3.125000e-02 : f32
    %14 = vector.broadcast %cst_17 : f32 to vector<1x258xf32>
    %15 = arith.mulf %13, %14 : vector<1x258xf32>
    %16 = vector.broadcast %15 : vector<1x258xf32> to vector<32x258xf32>
    %17 = arith.subf %9, %16 : vector<32x258xf32>
    %18 = arith.mulf %17, %17 : vector<32x258xf32>
    %cst_18 = arith.constant dense<0.000000e+00> : vector<258xf32>
    %19 = vector.multi_reduction <add>, %18, %cst_18 [0] : vector<32x258xf32> to vector<258xf32>
    %20 = vector.shape_cast %19 : vector<258xf32> to vector<1x258xf32>
    %cst_19 = arith.constant 3.125000e-02 : f32
    %21 = vector.broadcast %cst_19 : f32 to vector<1x258xf32>
    %22 = arith.mulf %20, %21 : vector<1x258xf32>
    %cst_20 = arith.constant 9.99999974E-6 : f32
    %23 = vector.broadcast %cst_20 : f32 to vector<1x258xf32>
    %24 = arith.addf %22, %23 : vector<1x258xf32>
    %25 = math.rsqrt %24 : vector<1x258xf32>
    %26 = vector.broadcast %25 : vector<1x258xf32> to vector<32x258xf32>
    %27 = arith.mulf %17, %26 : vector<32x258xf32>
    %28 = vector.broadcast %10 : vector<32x1xf32> to vector<32x258xf32>
    %29 = arith.mulf %27, %28 : vector<32x258xf32>
    %30 = vector.broadcast %11 : vector<32x1xf32> to vector<32x258xf32>
    %31 = arith.addf %29, %30 : vector<32x258xf32>
    %cst_21 = arith.constant 0.000000e+00 : f32
    %32 = vector.broadcast %cst_21 : f32 to vector<32x258xf32>
    %33 = arith.maximumf %31, %32 : vector<32x258xf32>
    %34 = vector.broadcast %5 : vector<1x258xf32> to vector<32x258xf32>
    %35 = arith.mulf %33, %34 : vector<32x258xf32>
    %c0_22 = arith.constant 0 : index
    %c0_23 = arith.constant 0 : index
    %c0_24 = arith.constant 0 : index
    %36 = vector.load %arg8[%c0_22, %c0_23, %c0_24] : memref<3x32x32xf32, #tpu.memory_space<vmem>>, vector<1x32x32xf32>
    %37 = vector.shape_cast %36 : vector<1x32x32xf32> to vector<32x32xf32>
    %38 = vector.extract_strided_slice %35 {offsets = [0, 0], sizes = [32, 256], strides = [1, 1]} : vector<32x258xf32> to vector<32x256xf32>
    %cst_25 = arith.constant dense<0.000000e+00> : vector<32x256xf32>
    %39 = tpu.matmul %37, %38, %cst_25 {dimension_numbers = #tpu.dot_dimension_numbers<[1], [0], [0], [1], [0, 0, 1, 1], [], []>} : vector<32x32xf32>, vector<32x256xf32>, vector<32x256xf32> -> vector<32x256xf32>
    %c0_26 = arith.constant 0 : index
    %c0_27 = arith.constant 0 : index
    %40 = vector.load %arg9[%c0_26, %c0_27] : memref<32x1xf32, #tpu.memory_space<vmem>>, vector<32x1xf32>
    %41 = vector.broadcast %40 : vector<32x1xf32> to vector<32x256xf32>
    %42 = arith.addf %39, %41 : vector<32x256xf32>
    %c1 = arith.constant 1 : index
    %c0_28 = arith.constant 0 : index
    %c0_29 = arith.constant 0 : index
    %43 = vector.load %arg8[%c1, %c0_28, %c0_29] : memref<3x32x32xf32, #tpu.memory_space<vmem>>, vector<1x32x32xf32>
    %44 = vector.shape_cast %43 : vector<1x32x32xf32> to vector<32x32xf32>
    %45 = vector.extract_strided_slice %35 {offsets = [0, 1], sizes = [32, 256], strides = [1, 1]} : vector<32x258xf32> to vector<32x256xf32>
    %cst_30 = arith.constant dense<0.000000e+00> : vector<32x256xf32>
    %46 = tpu.matmul %44, %45, %cst_30 {dimension_numbers = #tpu.dot_dimension_numbers<[1], [0], [0], [1], [0, 0, 1, 1], [], []>} : vector<32x32xf32>, vector<32x256xf32>, vector<32x256xf32> -> vector<32x256xf32>
    %47 = arith.addf %42, %46 : vector<32x256xf32>
    %c2 = arith.constant 2 : index
    %c0_31 = arith.constant 0 : index
    %c0_32 = arith.constant 0 : index
    %48 = vector.load %arg8[%c2, %c0_31, %c0_32] : memref<3x32x32xf32, #tpu.memory_space<vmem>>, vector<1x32x32xf32>
    %49 = vector.shape_cast %48 : vector<1x32x32xf32> to vector<32x32xf32>
    %50 = vector.extract_strided_slice %35 {offsets = [0, 2], sizes = [32, 256], strides = [1, 1]} : vector<32x258xf32> to vector<32x256xf32>
    %cst_33 = arith.constant dense<0.000000e+00> : vector<32x256xf32>
    %51 = tpu.matmul %49, %50, %cst_33 {dimension_numbers = #tpu.dot_dimension_numbers<[1], [0], [0], [1], [0, 0, 1, 1], [], []>} : vector<32x32xf32>, vector<32x256xf32>, vector<32x256xf32> -> vector<32x256xf32>
    %52 = arith.addf %47, %51 : vector<32x256xf32>
    %53 = vector.extract_strided_slice %3 {offsets = [0, 1], sizes = [1, 256], strides = [1, 1]} : vector<1x258xf32> to vector<1x256xf32>
    %54 = vector.broadcast %53 : vector<1x256xf32> to vector<32x256xf32>
    %55 = arith.mulf %52, %54 : vector<32x256xf32>
    %c0_34 = arith.constant 0 : index
    %c0_35 = arith.constant 0 : index
    %56 = vector.load %arg10[%c0_34, %c0_35] : memref<32x1xf32, #tpu.memory_space<vmem>>, vector<32x1xf32>
    %c0_36 = arith.constant 0 : index
    %c0_37 = arith.constant 0 : index
    %57 = vector.load %arg11[%c0_36, %c0_37] : memref<32x1xf32, #tpu.memory_space<vmem>>, vector<32x1xf32>
    %cst_38 = arith.constant dense<0.000000e+00> : vector<256xf32>
    %58 = vector.multi_reduction <add>, %55, %cst_38 [0] : vector<32x256xf32> to vector<256xf32>
    %59 = vector.shape_cast %58 : vector<256xf32> to vector<1x256xf32>
    %cst_39 = arith.constant 3.125000e-02 : f32
    %60 = vector.broadcast %cst_39 : f32 to vector<1x256xf32>
    %61 = arith.mulf %59, %60 : vector<1x256xf32>
    %62 = vector.broadcast %61 : vector<1x256xf32> to vector<32x256xf32>
    %63 = arith.subf %55, %62 : vector<32x256xf32>
    %64 = arith.mulf %63, %63 : vector<32x256xf32>
    %cst_40 = arith.constant dense<0.000000e+00> : vector<256xf32>
    %65 = vector.multi_reduction <add>, %64, %cst_40 [0] : vector<32x256xf32> to vector<256xf32>
    %66 = vector.shape_cast %65 : vector<256xf32> to vector<1x256xf32>
    %cst_41 = arith.constant 3.125000e-02 : f32
    %67 = vector.broadcast %cst_41 : f32 to vector<1x256xf32>
    %68 = arith.mulf %66, %67 : vector<1x256xf32>
    %cst_42 = arith.constant 9.99999974E-6 : f32
    %69 = vector.broadcast %cst_42 : f32 to vector<1x256xf32>
    %70 = arith.addf %68, %69 : vector<1x256xf32>
    %71 = math.rsqrt %70 : vector<1x256xf32>
    %72 = vector.broadcast %71 : vector<1x256xf32> to vector<32x256xf32>
    %73 = arith.mulf %63, %72 : vector<32x256xf32>
    %74 = vector.broadcast %56 : vector<32x1xf32> to vector<32x256xf32>
    %75 = arith.mulf %73, %74 : vector<32x256xf32>
    %76 = vector.broadcast %57 : vector<32x1xf32> to vector<32x256xf32>
    %77 = arith.addf %75, %76 : vector<32x256xf32>
    %cst_43 = arith.constant 0.000000e+00 : f32
    %78 = vector.broadcast %cst_43 : f32 to vector<32x256xf32>
    %79 = arith.maximumf %77, %78 : vector<32x256xf32>
    %c0_44 = arith.constant 0 : index
    %c0_45 = arith.constant 0 : index
    %c0_46 = arith.constant 0 : index
    %80 = vector.load %arg12[%c0_44, %c0_45, %c0_46] : memref<1x32x256xf32, #tpu.memory_space<vmem>>, vector<1x32x256xf32>
    %81 = vector.shape_cast %80 : vector<1x32x256xf32> to vector<32x256xf32>
    %82 = vector.shape_cast %79 : vector<32x256xf32> to vector<1x32x256xf32>
    tpu.vector_store %arg12[%c0_44, %c0_45, %c0_46], %82 {strides = array<i32>} : memref<1x32x256xf32, #tpu.memory_space<vmem>>, vector<1x32x256xf32>,
    return
  }
  func.func @transform_0(%arg0: i32, %arg1: i32) -> (i32, i32, i32, i32) {
    %c0_i32 = arith.constant 0 : i32
    %c0_i32_0 = arith.constant 0 : i32
    %c0_i32_1 = arith.constant 0 : i32
    return %arg0, %arg1, %c0_i32, %c0_i32_0 : i32, i32, i32, i32
  }
  func.func @transform_1(%arg0: i32, %arg1: i32) -> (i32, i32, i32, i32) {
    %c0_i32 = arith.constant 0 : i32
    %c0_i32_0 = arith.constant 0 : i32
    %c0_i32_1 = arith.constant 0 : i32
    return %arg0, %arg1, %c0_i32, %c0_i32_0 : i32, i32, i32, i32
  }
  func.func @transform_2(%arg0: i32, %arg1: i32) -> (i32, i32, i32) {
    %c0_i32 = arith.constant 0 : i32
    %c0_i32_0 = arith.constant 0 : i32
    %c0_i32_1 = arith.constant 0 : i32
    return %arg1, %c0_i32, %c0_i32_0 : i32, i32, i32
  }
  func.func @transform_3(%arg0: i32, %arg1: i32) -> (i32, i32) {
    %c0_i32 = arith.constant 0 : i32
    %c0_i32_0 = arith.constant 0 : i32
    %c0_i32_1 = arith.constant 0 : i32
    return %c0_i32, %c0_i32_0 : i32, i32
  }
  func.func @transform_4(%arg0: i32, %arg1: i32) -> (i32, i32) {
    %c0_i32 = arith.constant 0 : i32
    %c0_i32_0 = arith.constant 0 : i32
    %c0_i32_1 = arith.constant 0 : i32
    return %c0_i32, %c0_i32_0 : i32, i32
  }
  func.func @transform_5(%arg0: i32, %arg1: i32) -> (i32, i32) {
    %c0_i32 = arith.constant 0 : i32
    %c0_i32_0 = arith.constant 0 : i32
    %c0_i32_1 = arith.constant 0 : i32
    return %c0_i32, %c0_i32_0 : i32, i32
  }
  func.func @transform_6(%arg0: i32, %arg1: i32) -> (i32, i32, i32) {
    %c0_i32 = arith.constant 0 : i32
    %c0_i32_0 = arith.constant 0 : i32
    %c0_i32_1 = arith.constant 0 : i32
    %c0_i32_2 = arith.constant 0 : i32
    return %c0_i32, %c0_i32_0, %c0_i32_1 : i32, i32, i32
  }
  func.func @transform_7(%arg0: i32, %arg1: i32) -> (i32, i32) {
    %c0_i32 = arith.constant 0 : i32
    %c0_i32_0 = arith.constant 0 : i32
    %c0_i32_1 = arith.constant 0 : i32
    return %c0_i32, %c0_i32_0 : i32, i32
  }
  func.func @transform_8(%arg0: i32, %arg1: i32) -> (i32, i32) {
    %c0_i32 = arith.constant 0 : i32
    %c0_i32_0 = arith.constant 0 : i32
    %c0_i32_1 = arith.constant 0 : i32
    return %c0_i32, %c0_i32_0 : i32, i32
  }
  func.func @transform_9(%arg0: i32, %arg1: i32) -> (i32, i32) {
    %c0_i32 = arith.constant 0 : i32
    %c0_i32_0 = arith.constant 0 : i32
    %c0_i32_1 = arith.constant 0 : i32
    return %c0_i32, %c0_i32_0 : i32, i32
  }
  func.func @transform_10(%arg0: i32, %arg1: i32) -> (i32, i32, i32) {
    %c0_i32 = arith.constant 0 : i32
    %c0_i32_0 = arith.constant 0 : i32
    return %arg0, %c0_i32, %arg1 : i32, i32, i32
  }
}

</mosaic_0001>

<llo_original>
// kernel: embedding_module.1
$region0: #{embedding_module.1}
  #allocation0 [shape = 'u32[]', space=smem, size = 0x4, offset = 0x4, fixed_abs, tag = 'smem constant byte address 0x4 - core index']
  #allocation1 [shape = 'u32[144,128]{1,0:T(1,128)}', space=vmem, size = 0x12000, scoped, tag = 'internal scratch']
  %s0 = inlined_call_operand.vmem [shape: f32[2,1,25,258], index: 0, kind: input, shape index: {}]
  %s1 = inlined_call_operand.vmem [shape: f32[2,1,1,258], index: 1, kind: input, shape index: {}]
  %s2 = inlined_call_operand.vmem [shape: f32[1,1,258], index: 2, kind: input, shape index: {}]
  %s3 = inlined_call_operand.vmem [shape: f32[32,25], index: 3, kind: input, shape index: {}]
  %s4 = inlined_call_operand.vmem [shape: f32[32,1], index: 4, kind: input, shape index: {}]
  %s5 = inlined_call_operand.vmem [shape: f32[32,1], index: 5, kind: input, shape index: {}]
  %s6 = inlined_call_operand.vmem [shape: f32[3,32,32], index: 6, kind: input, shape index: {}]
  %s7 = inlined_call_operand.vmem [shape: f32[32,1], index: 7, kind: input, shape index: {}]
  %s8 = inlined_call_operand.vmem [shape: f32[32,1], index: 8, kind: input, shape index: {}]
  %s9 = inlined_call_operand.vmem [shape: f32[32,1], index: 9, kind: input, shape index: {}]
  %s10 = inlined_call_operand.hbm [shape: f32[2,32,256], index: 10, kind: output, shape index: {}]
  %s11 = sld [smem:[#allocation0]]
  $region73: #{embedding_module.1} parent=0
    _
  %s13 = ssub.s32 1, %s11
  %s14 = scalar_select 0, %s13, %s11
  $region1: #{embedding_module.1} parent=0
    #allocation2 [shape = 'u8[65536]{0}', space=vmem, size = 0x10000, scoped, tag = 'output window, operand 0']
    #allocation3 [shape = 's32[2]{0}', space=sflag, size = 0x8, scoped, tag = 'scoped memory for embedding_module.1']
    %15 = vsyncpa [#allocation3], 0
    %s16 = scalar_lea.sflag [#allocation3], 1
    %17 = vsyncpa %s16, 0
    loop: start=0, step=1, limit=4
    $region2: #{embedding_module.1} parent=1 // loop_pre_header
      _
    $region3: #{embedding_module.1} parent=1 // loop_header
      %s19 = sphi 0, %s23
      %p20 = scmp.ge.s32.totalorder %s19, 4
      %s26 = sphi 0, %s38
      %s27 = sphi 0, %s34
      %s28 = sphi 0, %s26
      %s29 = sphi 0, %s27
      %s30 = sphi 0, %s28
      %s31 = sphi 0, %s29
      %s43 = sphi 0, %s45
      %s46 = sphi 0, %s43
      %s47 = sphi 0, %s46
      %s63 = sphi 0, %s47
      %s71 = sphi 0, %s73
      %s74 = sphi 0, %s71
      %s75 = sphi 0, %s74
      %s91 = sphi 0, %s75
      %s97 = sphi 0, %s99
      %s100 = sphi 0, %s97
      %s101 = sphi 0, %s100
      %s117 = sphi 0, %s101
      %s121 = sphi 0, %s121
      %s123 = sphi 0, %s121
      %s124 = sphi 0, %s123
      %s138 = sphi 0, %s124
      %s142 = sphi 0, %s142
      %s144 = sphi 0, %s142
      %s145 = sphi 0, %s144
      %s159 = sphi 0, %s145
      %s163 = sphi 0, %s163
      %s165 = sphi 0, %s163
      %s166 = sphi 0, %s165
      %s180 = sphi 0, %s166
      %s184 = sphi 0, %s184
      %s186 = sphi 0, %s184
      %s187 = sphi 0, %s186
      %s201 = sphi 0, %s187
      %s205 = sphi 0, %s205
      %s207 = sphi 0, %s205
      %s208 = sphi 0, %s207
      %s222 = sphi 0, %s208
      %s226 = sphi 0, %s226
      %s228 = sphi 0, %s226
      %s229 = sphi 0, %s228
      %s243 = sphi 0, %s229
      %s247 = sphi 0, %s247
      %s249 = sphi 0, %s247
      %s250 = sphi 0, %s249
      %s264 = sphi 0, %s250
      %s272 = sphi 0, %s274
      %s275 = sphi 0, %s272
      %s276 = sphi 0, %s275
      %s292 = sphi 0, %s276
    $region4: #{embedding_module.1} parent=1 // loop_header_branch
      %22 = sbr.rel (%p20) target = $region8
    $region5: #{embedding_module.1} parent=1 // loop_body
      %s24 = ssub.s32 %s19, 1
      %s25 = ssub.s32 %s19, 2
      %s32 = sadd.s32 1, %s27
      %p33 = scmp.ge.s32.totalorder %s32, 1
      %s34 = scalar_select %p33, 0, %s32
      %s35 = sadd.s32 1, %s26
      %s36 = scalar_select %p33, %s35, %s26
      %p37 = scmp.ge.s32.totalorder %s36, 2
      %s38 = scalar_select %p37, 0, %s36
      %s39 = ssub.s32 %s26, %s38
      %s40 = ssub.s32 %s27, %s34
      %s41 = sor.u32 %s39, %s40
      %p42 = scmp.eq.s32.totalorder %s41, 0
      %s44 = sadd.s32 %s43, 1
      %s45 = scalar_select %p42, %s43, %s44
      %p48 = pneg %p42
      %p49 = scmp.eq.s32.totalorder %s19, 1
      %p50 = por %p48, %p49
      %p51 = scmp.ne.s32.totalorder %s43, %s46
      %p52 = scmp.eq.s32.totalorder %s19, 0
      %p53 = por %p51, %p52
      %p54 = scmp.ne.s32.totalorder %s43, %s46
      %p55 = scmp.eq.s32.totalorder %s24, 1
      %p56 = por %p54, %p55
      %p57 = scmp.ne.s32.totalorder %s46, %s47
      %p58 = scmp.eq.s32.totalorder %s24, 0
      %p59 = por %p57, %p58
      %p60 = scmp.ne.s32.totalorder %s46, %s47
      %p61 = scmp.eq.s32.totalorder %s25, 1
      %p62 = por %p60, %p61
      %p64 = scmp.ne.s32.totalorder %s47, %s63
      %p65 = scmp.eq.s32.totalorder %s25, 0
      %p66 = por %p64, %p65
      %s67 = ssub.s32 %s26, %s38
      %s68 = ssub.s32 %s27, %s34
      %s69 = sor.u32 %s67, %s68
      %p70 = scmp.eq.s32.totalorder %s69, 0
      %s72 = sadd.s32 %s71, 1
      %s73 = scalar_select %p70, %s71, %s72
      %p76 = pneg %p70
      %p77 = scmp.eq.s32.totalorder %s19, 1
      %p78 = por %p76, %p77
      %p79 = scmp.ne.s32.totalorder %s71, %s74
      %p80 = scmp.eq.s32.totalorder %s19, 0
      %p81 = por %p79, %p80
      %p82 = scmp.ne.s32.totalorder %s71, %s74
      %p83 = scmp.eq.s32.totalorder %s24, 1
      %p84 = por %p82, %p83
      %p85 = scmp.ne.s32.totalorder %s74, %s75
      %p86 = scmp.eq.s32.totalorder %s24, 0
      %p87 = por %p85, %p86
      %p88 = scmp.ne.s32.totalorder %s74, %s75
      %p89 = scmp.eq.s32.totalorder %s25, 1
      %p90 = por %p88, %p89
      %p92 = scmp.ne.s32.totalorder %s75, %s91
      %p93 = scmp.eq.s32.totalorder %s25, 0
      %p94 = por %p92, %p93
      %s95 = ssub.s32 %s27, %s34
      %p96 = scmp.eq.s32.totalorder %s95, 0
      %s98 = sadd.s32 %s97, 1
      %s99 = scalar_select %p96, %s97, %s98
      %p102 = pneg %p96
      %p103 = scmp.eq.s32.totalorder %s19, 1
      %p104 = por %p102, %p103
      %p105 = scmp.ne.s32.totalorder %s97, %s100
      %p106 = scmp.eq.s32.totalorder %s19, 0
      %p107 = por %p105, %p106
      %p108 = scmp.ne.s32.totalorder %s97, %s100
      %p109 = scmp.eq.s32.totalorder %s24, 1
      %p110 = por %p108, %p109
      %p111 = scmp.ne.s32.totalorder %s100, %s101
      %p112 = scmp.eq.s32.totalorder %s24, 0
      %p113 = por %p111, %p112
      %p114 = scmp.ne.s32.totalorder %s100, %s101
      %p115 = scmp.eq.s32.totalorder %s25, 1
      %p116 = por %p114, %p115
      %p118 = scmp.ne.s32.totalorder %s101, %s117
      %p119 = scmp.eq.s32.totalorder %s25, 0
      %p120 = por %p118, %p119
      %s122 = sadd.s32 %s121, 1
      %p125 = scmp.eq.s32.totalorder %s19, 1
      %p126 = scmp.ne.s32.totalorder %s121, %s123
      %p127 = scmp.eq.s32.totalorder %s19, 0
      %p128 = por %p126, %p127
      %p129 = scmp.ne.s32.totalorder %s121, %s123
      %p130 = scmp.eq.s32.totalorder %s24, 1
      %p131 = por %p129, %p130
      %p132 = scmp.ne.s32.totalorder %s123, %s124
      %p133 = scmp.eq.s32.totalorder %s24, 0
      %p134 = por %p132, %p133
      %p135 = scmp.ne.s32.totalorder %s123, %s124
      %p136 = scmp.eq.s32.totalorder %s25, 1
      %p137 = por %p135, %p136
      %p139 = scmp.ne.s32.totalorder %s124, %s138
      %p140 = scmp.eq.s32.totalorder %s25, 0
      %p141 = por %p139, %p140
      %s143 = sadd.s32 %s142, 1
      %p146 = scmp.eq.s32.totalorder %s19, 1
      %p147 = scmp.ne.s32.totalorder %s142, %s144
      %p148 = scmp.eq.s32.totalorder %s19, 0
      %p149 = por %p147, %p148
      %p150 = scmp.ne.s32.totalorder %s142, %s144
      %p151 = scmp.eq.s32.totalorder %s24, 1
      %p152 = por %p150, %p151
      %p153 = scmp.ne.s32.totalorder %s144, %s145
      %p154 = scmp.eq.s32.totalorder %s24, 0
      %p155 = por %p153, %p154
      %p156 = scmp.ne.s32.totalorder %s144, %s145
      %p157 = scmp.eq.s32.totalorder %s25, 1
      %p158 = por %p156, %p157
      %p160 = scmp.ne.s32.totalorder %s145, %s159
      %p161 = scmp.eq.s32.totalorder %s25, 0
      %p162 = por %p160, %p161
      %s164 = sadd.s32 %s163, 1
      %p167 = scmp.eq.s32.totalorder %s19, 1
      %p168 = scmp.ne.s32.totalorder %s163, %s165
      %p169 = scmp.eq.s32.totalorder %s19, 0
      %p170 = por %p168, %p169
      %p171 = scmp.ne.s32.totalorder %s163, %s165
      %p172 = scmp.eq.s32.totalorder %s24, 1
      %p173 = por %p171, %p172
      %p174 = scmp.ne.s32.totalorder %s165, %s166
      %p175 = scmp.eq.s32.totalorder %s24, 0
      %p176 = por %p174, %p175
      %p177 = scmp.ne.s32.totalorder %s165, %s166
      %p178 = scmp.eq.s32.totalorder %s25, 1
      %p179 = por %p177, %p178
      %p181 = scmp.ne.s32.totalorder %s166, %s180
      %p182 = scmp.eq.s32.totalorder %s25, 0
      %p183 = por %p181, %p182
      %s185 = sadd.s32 %s184, 1
      %p188 = scmp.eq.s32.totalorder %s19, 1
      %p189 = scmp.ne.s32.totalorder %s184, %s186
      %p190 = scmp.eq.s32.totalorder %s19, 0
      %p191 = por %p189, %p190
      %p192 = scmp.ne.s32.totalorder %s184, %s186
      %p193 = scmp.eq.s32.totalorder %s24, 1
      %p194 = por %p192, %p193
      %p195 = scmp.ne.s32.totalorder %s186, %s187
      %p196 = scmp.eq.s32.totalorder %s24, 0
      %p197 = por %p195, %p196
      %p198 = scmp.ne.s32.totalorder %s186, %s187
      %p199 = scmp.eq.s32.totalorder %s25, 1
      %p200 = por %p198, %p199
      %p202 = scmp.ne.s32.totalorder %s187, %s201
      %p203 = scmp.eq.s32.totalorder %s25, 0
      %p204 = por %p202, %p203
      %s206 = sadd.s32 %s205, 1
      %p209 = scmp.eq.s32.totalorder %s19, 1
      %p210 = scmp.ne.s32.totalorder %s205, %s207
      %p211 = scmp.eq.s32.totalorder %s19, 0
      %p212 = por %p210, %p211
      %p213 = scmp.ne.s32.totalorder %s205, %s207
      %p214 = scmp.eq.s32.totalorder %s24, 1
      %p215 = por %p213, %p214
      %p216 = scmp.ne.s32.totalorder %s207, %s208
      %p217 = scmp.eq.s32.totalorder %s24, 0
      %p218 = por %p216, %p217
      %p219 = scmp.ne.s32.totalorder %s207, %s208
      %p220 = scmp.eq.s32.totalorder %s25, 1
      %p221 = por %p219, %p220
      %p223 = scmp.ne.s32.totalorder %s208, %s222
      %p224 = scmp.eq.s32.totalorder %s25, 0
      %p225 = por %p223, %p224
      %s227 = sadd.s32 %s226, 1
      %p230 = scmp.eq.s32.totalorder %s19, 1
      %p231 = scmp.ne.s32.totalorder %s226, %s228
      %p232 = scmp.eq.s32.totalorder %s19, 0
      %p233 = por %p231, %p232
      %p234 = scmp.ne.s32.totalorder %s226, %s228
      %p235 = scmp.eq.s32.totalorder %s24, 1
      %p236 = por %p234, %p235
      %p237 = scmp.ne.s32.totalorder %s228, %s229
      %p238 = scmp.eq.s32.totalorder %s24, 0
      %p239 = por %p237, %p238
      %p240 = scmp.ne.s32.totalorder %s228, %s229
      %p241 = scmp.eq.s32.totalorder %s25, 1
      %p242 = por %p240, %p241
      %p244 = scmp.ne.s32.totalorder %s229, %s243
      %p245 = scmp.eq.s32.totalorder %s25, 0
      %p246 = por %p244, %p245
      %s248 = sadd.s32 %s247, 1
      %p251 = scmp.eq.s32.totalorder %s19, 1
      %p252 = scmp.ne.s32.totalorder %s247, %s249
      %p253 = scmp.eq.s32.totalorder %s19, 0
      %p254 = por %p252, %p253
      %p255 = scmp.ne.s32.totalorder %s247, %s249
      %p256 = scmp.eq.s32.totalorder %s24, 1
      %p257 = por %p255, %p256
      %p258 = scmp.ne.s32.totalorder %s249, %s250
      %p259 = scmp.eq.s32.totalorder %s24, 0
      %p260 = por %p258, %p259
      %p261 = scmp.ne.s32.totalorder %s249, %s250
      %p262 = scmp.eq.s32.totalorder %s25, 1
      %p263 = por %p261, %p262
      %p265 = scmp.ne.s32.totalorder %s250, %s264
      %p266 = scmp.eq.s32.totalorder %s25, 0
      %p267 = por %p265, %p266
      %s268 = ssub.s32 %s26, %s38
      %s269 = ssub.s32 %s27, %s34
      %s270 = sor.u32 %s268, %s269
      %p271 = scmp.eq.s32.totalorder %s270, 0
      %s273 = sadd.s32 %s272, 1
      %s274 = scalar_select %p271, %s272, %s273
      %p277 = pneg %p271
      %p278 = scmp.eq.s32.totalorder %s19, 1
      %p279 = por %p277, %p278
      %p280 = scmp.ne.s32.totalorder %s272, %s275
      %p281 = scmp.eq.s32.totalorder %s19, 0
      %p282 = por %p280, %p281
      %p283 = scmp.ne.s32.totalorder %s272, %s275
      %p284 = scmp.eq.s32.totalorder %s24, 1
      %p285 = por %p283, %p284
      %p286 = scmp.ne.s32.totalorder %s275, %s276
      %p287 = scmp.eq.s32.totalorder %s24, 0
      %p288 = por %p286, %p287
      %p289 = scmp.ne.s32.totalorder %s275, %s276
      %p290 = scmp.eq.s32.totalorder %s25, 1
      %p291 = por %p289, %p290
      %p293 = scmp.ne.s32.totalorder %s276, %s292
      %p294 = scmp.eq.s32.totalorder %s25, 0
      %p295 = por %p293, %p294
      %p296 = scmp.le.s32.totalorder 1, %s19
      %p297 = scmp.lt.s32.totalorder %s19, 3
      %p298 = pnand %p296, %p297
      %p299 = pneg %p298
      // Predicated region
      $region9: #{embedding_module.1} parent=5 // pred_check
        _
      $region10: #{embedding_module.1} parent=5 // pred_check_branch
        %301 = sbr.rel (%p298) target = $region12
      $region11: #{embedding_module.1} parent=5 // pred_region
        %s302 = ssub.s32 %s19, 1
        // Predicated region
        $region13: #{embedding_module.1} parent=11 // pred_check
          %p303 = pneg %p113
        $region14: #{embedding_module.1} parent=11 // pred_check_branch
          %305 = sbr.rel (%p303) target = $region16
        $region15: #{embedding_module.1} parent=11 // pred_region
          %p306 = scmp.lt.s32.totalorder %s29, 0
          %s307 = scalar_select %p306, %s29, 0
          %s308 = smul.addr %s307, 3
          %s309 = scalar_lea.vmem %s2, %s308
        $region16: #{embedding_module.1} parent=11 // pred_fallthru
          _
        // Predicated region
        $region17: #{embedding_module.1} parent=11 // pred_check
          %p310 = pneg %p134
        $region18: #{embedding_module.1} parent=11 // pred_check_branch
          %312 = sbr.rel (%p310) target = $region20
        $region19: #{embedding_module.1} parent=11 // pred_region
          _
        $region20: #{embedding_module.1} parent=11 // pred_fallthru
          _
        // Predicated region
        $region21: #{embedding_module.1} parent=11 // pred_check
          %p313 = pneg %p155
        $region22: #{embedding_module.1} parent=11 // pred_check_branch
          %315 = sbr.rel (%p313) target = $region24
        $region23: #{embedding_module.1} parent=11 // pred_region
          _
        $region24: #{embedding_module.1} parent=11 // pred_fallthru
          _
        // Predicated region
        $region25: #{embedding_module.1} parent=11 // pred_check
          %p316 = pneg %p176
        $region26: #{embedding_module.1} parent=11 // pred_check_branch
          %318 = sbr.rel (%p316) target = $region28
        $region27: #{embedding_module.1} parent=11 // pred_region
          _
        $region28: #{embedding_module.1} parent=11 // pred_fallthru
          _
        // Predicated region
        $region29: #{embedding_module.1} parent=11 // pred_check
          %p319 = pneg %p197
        $region30: #{embedding_module.1} parent=11 // pred_check_branch
          %321 = sbr.rel (%p319) target = $region32
        $region31: #{embedding_module.1} parent=11 // pred_region
          _
        $region32: #{embedding_module.1} parent=11 // pred_fallthru
          _
        // Predicated region
        $region33: #{embedding_module.1} parent=11 // pred_check
          %p322 = pneg %p218
        $region34: #{embedding_module.1} parent=11 // pred_check_branch
          %324 = sbr.rel (%p322) target = $region36
        $region35: #{embedding_module.1} parent=11 // pred_region
          _
        $region36: #{embedding_module.1} parent=11 // pred_fallthru
          _
        // Predicated region
        $region37: #{embedding_module.1} parent=11 // pred_check
          %p325 = pneg %p239
        $region38: #{embedding_module.1} parent=11 // pred_check_branch
          %327 = sbr.rel (%p325) target = $region40
        $region39: #{embedding_module.1} parent=11 // pred_region
          _
        $region40: #{embedding_module.1} parent=11 // pred_fallthru
          _
        // Predicated region
        $region41: #{embedding_module.1} parent=11 // pred_check
          %p328 = pneg %p260
        $region42: #{embedding_module.1} parent=11 // pred_check_branch
          %330 = sbr.rel (%p328) target = $region44
        $region43: #{embedding_module.1} parent=11 // pred_region
          _
        $region44: #{embedding_module.1} parent=11 // pred_fallthru
          _
      $region12: #{embedding_module.1} parent=5 // pred_fallthru
        _
      %p331 = scmp.lt.s32.totalorder %s19, 2
      // Predicated region
      $region45: #{embedding_module.1} parent=5 // pred_check
        %p332 = pneg %p331
      $region46: #{embedding_module.1} parent=5 // pred_check_branch
        %334 = sbr.rel (%p332) target = $region48
      $region47: #{embedding_module.1} parent=5 // pred_region
        // Predicated region
        $region49: #{embedding_module.1} parent=47 // pred_check
          %p335 = pneg %p53
        $region50: #{embedding_module.1} parent=47 // pred_check_branch
          %337 = sbr.rel (%p335) target = $region52
        $region51: #{embedding_module.1} parent=47 // pred_region
          %p338 = scmp.lt.s32.totalorder %s26, 1
          %s339 = scalar_select %p338, %s26, 1
          %p340 = scmp.lt.s32.totalorder %s27, 0
          %s341 = scalar_select %p340, %s27, 0
          %s342 = smul.addr %s341, 12
          %s343 = smul.addr %s339, 12
          %s344 = sadd.s32 %s342, %s343
          %s345 = smul.addr %s344, 8
          %s346 = scalar_lea.vmem %s0, %s345
        $region52: #{embedding_module.1} parent=47 // pred_fallthru
          _
        // Predicated region
        $region53: #{embedding_module.1} parent=47 // pred_check
          %p347 = pneg %p81
        $region54: #{embedding_module.1} parent=47 // pred_check_branch
          %349 = sbr.rel (%p347) target = $region56
        $region55: #{embedding_module.1} parent=47 // pred_region
          %p350 = scmp.lt.s32.totalorder %s26, 1
          %s351 = scalar_select %p350, %s26, 1
          %p352 = scmp.lt.s32.totalorder %s27, 0
          %s353 = scalar_select %p352, %s27, 0
          %s354 = smul.addr %s353, 3
          %s355 = smul.addr %s351, 3
          %s356 = sadd.s32 %s354, %s355
          %s357 = scalar_lea.vmem %s1, %s356
        $region56: #{embedding_module.1} parent=47 // pred_fallthru
          _
      $region48: #{embedding_module.1} parent=5 // pred_fallthru
        _
      %p358 = scmp.le.s32.totalorder 1, %s19
      %p359 = scmp.lt.s32.totalorder %s19, 3
      %p360 = pnand %p358, %p359
      %p361 = pneg %p360
      // Predicated region
      $region57: #{embedding_module.1} parent=5 // pred_check
        _
      $region58: #{embedding_module.1} parent=5 // pred_check_branch
        %363 = sbr.rel (%p360) target = $region60
      $region59: #{embedding_module.1} parent=5 // pred_region
        %s364 = ssub.s32 %s19, 1
        %p365 = scmp.lt.s32.totalorder %s28, 1
        %s366 = scalar_select %p365, %s28, 1
        %p367 = scmp.lt.s32.totalorder %s29, 0
        %s368 = scalar_select %p367, %s29, 0
        %s369 = smul.addr %s368, 12
        %s370 = smul.addr %s366, 12
        %s371 = sadd.s32 %s369, %s370
        %s372 = smul.addr %s371, 8
        %s373 = scalar_lea.vmem %s0, %s372
        %p374 = pneg %p59
        %p375 = pneg %p56
        %p376 = scmp.lt.s32.totalorder %s28, 1
        %s377 = scalar_select %p376, %s28, 1
        %p378 = scmp.lt.s32.totalorder %s29, 0
        %s379 = scalar_select %p378, %s29, 0
        %s380 = smul.addr %s379, 3
        %s381 = smul.addr %s377, 3
        %s382 = sadd.s32 %s380, %s381
        %s383 = scalar_lea.vmem %s1, %s382
        %p384 = pneg %p87
        %p385 = pneg %p84
        %p386 = scmp.lt.s32.totalorder %s29, 0
        %s387 = scalar_select %p386, %s29, 0
        %s388 = smul.addr %s387, 3
        %s389 = scalar_lea.vmem %s2, %s388
        %p390 = pneg %p113
        %p391 = pneg %p110
        %p392 = pneg %p134
        %p393 = pneg %p131
        %p394 = pneg %p155
        %p395 = pneg %p152
        %p396 = pneg %p176
        %p397 = pneg %p173
        %p398 = pneg %p197
        %p399 = pneg %p194
        %p400 = pneg %p218
        %p401 = pneg %p215
        %p402 = pneg %p239
        %p403 = pneg %p236
        %p404 = pneg %p260
        %p405 = pneg %p257
        %p406 = pneg %p288
        %p407 = pneg %p285
        %s408 = sand.u32 %s275, 1
        %s409 = scalar_lea.sflag [#allocation3], %s408
        %s410 = sand.u32 %s275, 1
        %s411 = smul.addr %s410, 64
        %s412 = scalar_lea.vmem [#allocation2], %s411
        %p413 = scmp.lt.s32.totalorder %s28, 1
        %s414 = scalar_select %p413, %s28, 1
        %p415 = scmp.lt.s32.totalorder %s29, 0
        %s416 = scalar_select %p415, %s29, 0
        %s417 = smul.addr %s416, 12
        %s418 = smul.addr %s414, 12
        %s419 = sadd.s32 %s417, %s418
        %s420 = smul.addr %s419, 8
        %s421 = scalar_lea.vmem %s0, %s420
        %p422 = scmp.lt.s32.totalorder %s28, 1
        %s423 = scalar_select %p422, %s28, 1
        %p424 = scmp.lt.s32.totalorder %s29, 0
        %s425 = scalar_select %p424, %s29, 0
        %s426 = smul.addr %s425, 3
        %s427 = smul.addr %s423, 3
        %s428 = sadd.s32 %s426, %s427
        %s429 = scalar_lea.vmem %s1, %s428
        %p430 = scmp.lt.s32.totalorder %s29, 0
        %s431 = scalar_select %p430, %s29, 0
        %s432 = smul.addr %s431, 3
        %s433 = scalar_lea.vmem %s2, %s432
        %s434 = smul.u32 2, %s29
        %v435 = vld [vmem:[%s421] sm:$0xff]
        %v436 = vld [vmem:[%s421 + $0x8] sm:$0xff]
        %v437 = vld [vmem:[%s421 + $0x10] sm:$0xff]
        %v438 = vld [vmem:[%s421 + $0x18] sm:$0xff]
        %v439 = vld [vmem:[%s421 + $0x20] sm:$0xff]
        %v440 = vld [vmem:[%s421 + $0x28] sm:$0xff]
        %v441 = vld [vmem:[%s421 + $0x30] sm:$0xff]
        %v442 = vld [vmem:[%s421 + $0x38] sm:$0xff]
        %v443 = vld [vmem:[%s421 + $0x40] sm:$0xff]
        %v444 = vld [vmem:[%s421 + $0x48] sm:$0x1]
        %v445 = vld [vmem:[%s421 + $0x50] sm:$0x1]
        %v446 = vld [vmem:[%s421 + $0x58] sm:$0x1]
        %v447 = vld [vmem:[%s429] sm:$0x7]
        %v448 = vld [vmem:[%s433] sm:$0x7]
        %v449 = vld [vmem:[%s3] sm:$0xff]
        %v450 = vld [vmem:[%s3 + $0x8] sm:$0xff]
        %v451 = vld [vmem:[%s3 + $0x10] sm:$0xff]
        %v452 = vld [vmem:[%s3 + $0x18] sm:$0xff]
        %vm453 = vcmask 203776
        %v455 = vsel %vm453, %v449, 0
        %v458 = vsel %vm453, %v450, 0
        %v461 = vsel %vm453, %v451, 0
        %v464 = vsel %vm453, %v452, 0
        %vm466 = vcmask 1040384
        %v468 = vsel %vm466, %v444, 0
        %v471 = vsel %vm466, %v445, 0
        %v474 = vsel %vm466, %v446, 0
        %476 = vmatprep.subr.mxu0 %v436
        %477 = vmatpush1.msra.mxu0 %v435
        %478 = vmatprep.subr.mxu0 %v439
        %479 = vmatpush1.msra.mxu0 %v438
        %480 = vmatprep.subr.mxu0 %v442
        %481 = vmatpush1.msra.mxu0 %v441
        %482 = vmatprep.subr.mxu0 %v471
        %483 = vmatpush1.msra.mxu0 %v468
        %484 = vmatprep.subr.mxu0 0.0
        %485 = vmatpush1.msra.mxu0 0.0
        %486 = vmatprep.subr.mxu0 0.0
        %487 = vmatpush1.msra.mxu0 0.0
        %488 = vmatprep.subr.mxu0 0.0
        %489 = vmatpush1.msra.mxu0 0.0
        %490 = vmatprep.subr.mxu0 0.0
        %491 = vmatpush1.msra.mxu0 0.0
        %492 = vmatprep.subr.mxu0 0.0
        %493 = vmatpush1.msra.mxu0 0.0
        %494 = vmatprep.subr.mxu0 0.0
        %495 = vmatpush1.msra.mxu0 0.0
        %496 = vmatprep.subr.mxu0 0.0
        %497 = vmatpush1.msra.mxu0 0.0
        %498 = vmatprep.subr.mxu0 0.0
        %499 = vmatpush1.msra.mxu0 0.0
        %500 = vmatprep.subr.mxu0 0.0
        %501 = vmatpush1.msra.mxu0 0.0
        %502 = vmatprep.subr.mxu0 0.0
        %503 = vmatpush1.msra.mxu0 0.0
        %504 = vmatprep.subr.mxu0 0.0
        %505 = vmatpush1.msra.mxu0 0.0
        %506 = vmatprep.subr.mxu0 0.0
        %507 = vmatpush1.msra.mxu0 0.0
        %508 = vmatprep.subr.mxu0 0.0
        %509 = vmatpush1.msra.mxu0 0.0
        %510 = vmatprep.subr.mxu0 0.0
        %511 = vmatpush1.msra.mxu0 0.0
        %512 = vmatprep.subr.mxu0 0.0
        %513 = vmatpush1.msra.mxu0 0.0
        %514 = vmatprep.subr.mxu0 0.0
        %515 = vmatpush1.msra.mxu0 0.0
        %516 = vmatprep.subr.mxu0 0.0
        %517 = vmatpush1.msra.mxu0 0.0
        %518 = vmatprep.subr.mxu0 0.0
        %519 = vmatpush1.msra.mxu0 0.0
        %520 = vmatprep.subr.mxu0 0.0
        %521 = vmatpush1.msra.mxu0 0.0
        %522 = vmatprep.subr.mxu0 0.0
        %523 = vmatpush1.msra.mxu0 0.0
        %524 = vmatprep.subr.mxu0 0.0
        %525 = vmatpush1.msra.mxu0 0.0
        %526 = vmatprep.subr.mxu0 0.0
        %527 = vmatpush1.msra.mxu0 0.0
        %528 = vmatprep.subr.mxu0 0.0
        %529 = vmatpush1.msra.mxu0 0.0
        %530 = vmatprep.subr.mxu0 0.0
        %531 = vmatpush1.msra.mxu0 0.0
        %532 = vmatprep.subr.mxu0 0.0
        %533 = vmatpush1.msra.mxu0 0.0
        %534 = vmatprep.subr.mxu0 0.0
        %535 = vmatpush1.msra.mxu0 0.0
        %536 = vmatprep.subr.mxu0 0.0
        %537 = vmatpush1.msra.mxu0 0.0
        %538 = vmatprep.subr.mxu0 0.0
        %539 = vmatpush1.msra.mxu0 0.0
        %540 = vmatprep.mubr.f32.mxu0 0.0
        %541 = vmatmul.mubr.f32.gmra.mrb[0].mxu0 %v455
        %v542 = vpop.f32.mrb[0].mxu0
        %v543 = vadd.f32 0.0, %v542
        %v544 = vpop.f32.mrb[0].mxu0
        %v545 = vadd.f32 0.0, %v544
        %546 = vmatprep.mubr.f32.mxu0 0.0
        %547 = vmatmul.mubr.f32.gmra.mrb[0].mxu0 %v458
        %v548 = vpop.f32.mrb[0].mxu0
        %v549 = vadd.f32 0.0, %v548
        %v550 = vpop.f32.mrb[0].mxu0
        %v551 = vadd.f32 0.0, %v550
        %552 = vmatprep.mubr.f32.mxu0 0.0
        %553 = vmatmul.mubr.f32.gmra.mrb[0].mxu0 %v461
        %v554 = vpop.f32.mrb[0].mxu0
        %v555 = vadd.f32 0.0, %v554
        %v556 = vpop.f32.mrb[0].mxu0
        %v557 = vadd.f32 0.0, %v556
        %558 = vmatprep.mubr.f32.mxu0 0.0
        %559 = vmatmul.mubr.f32.gmra.mrb[0].mxu0 %v464
        %v560 = vpop.f32.mrb[0].mxu0
        %v561 = vadd.f32 0.0, %v560
        %v562 = vpop.f32.mrb[0].mxu0
        %v563 = vadd.f32 0.0, %v562
        %564 = vdwg.mxu0
        %565 = vmatprep.subr.mxu0 0.0
        %566 = vmatpush1.msra.mxu0 %v437
        %567 = vmatprep.subr.mxu0 0.0
        %568 = vmatpush1.msra.mxu0 %v440
        %569 = vmatprep.subr.mxu0 0.0
        %570 = vmatpush1.msra.mxu0 %v443
        %571 = vmatprep.subr.mxu0 0.0
        %572 = vmatpush1.msra.mxu0 %v474
        %573 = vmatprep.subr.mxu0 0.0
        %574 = vmatpush1.msra.mxu0 0.0
        %575 = vmatprep.subr.mxu0 0.0
        %576 = vmatpush1.msra.mxu0 0.0
        %577 = vmatprep.subr.mxu0 0.0
        %578 = vmatpush1.msra.mxu0 0.0
        %579 = vmatprep.subr.mxu0 0.0
        %580 = vmatpush1.msra.mxu0 0.0
        %581 = vmatprep.subr.mxu0 0.0
        %582 = vmatpush1.msra.mxu0 0.0
        %583 = vmatprep.subr.mxu0 0.0
        %584 = vmatpush1.msra.mxu0 0.0
        %585 = vmatprep.subr.mxu0 0.0
        %586 = vmatpush1.msra.mxu0 0.0
        %587 = vmatprep.subr.mxu0 0.0
        %588 = vmatpush1.msra.mxu0 0.0
        %589 = vmatprep.subr.mxu0 0.0
        %590 = vmatpush1.msra.mxu0 0.0
        %591 = vmatprep.subr.mxu0 0.0
        %592 = vmatpush1.msra.mxu0 0.0
        %593 = vmatprep.subr.mxu0 0.0
        %594 = vmatpush1.msra.mxu0 0.0
        %595 = vmatprep.subr.mxu0 0.0
        %596 = vmatpush1.msra.mxu0 0.0
        %597 = vmatprep.subr.mxu0 0.0
        %598 = vmatpush1.msra.mxu0 0.0
        %599 = vmatprep.subr.mxu0 0.0
        %600 = vmatpush1.msra.mxu0 0.0
        %601 = vmatprep.subr.mxu0 0.0
        %602 = vmatpush1.msra.mxu0 0.0
        %603 = vmatprep.subr.mxu0 0.0
        %604 = vmatpush1.msra.mxu0 0.0
        %605 = vmatprep.subr.mxu0 0.0
        %606 = vmatpush1.msra.mxu0 0.0
        %607 = vmatprep.subr.mxu0 0.0
        %608 = vmatpush1.msra.mxu0 0.0
        %609 = vmatprep.subr.mxu0 0.0
        %610 = vmatpush1.msra.mxu0 0.0
        %611 = vmatprep.subr.mxu0 0.0
        %612 = vmatpush1.msra.mxu0 0.0
        %613 = vmatprep.subr.mxu0 0.0
        %614 = vmatpush1.msra.mxu0 0.0
        %615 = vmatprep.subr.mxu0 0.0
        %616 = vmatpush1.msra.mxu0 0.0
        %617 = vmatprep.subr.mxu0 0.0
        %618 = vmatpush1.msra.mxu0 0.0
        %619 = vmatprep.subr.mxu0 0.0
        %620 = vmatpush1.msra.mxu0 0.0
        %621 = vmatprep.subr.mxu0 0.0
        %622 = vmatpush1.msra.mxu0 0.0
        %623 = vmatprep.subr.mxu0 0.0
        %624 = vmatpush1.msra.mxu0 0.0
        %625 = vmatprep.subr.mxu0 0.0
        %626 = vmatpush1.msra.mxu0 0.0
        %627 = vmatprep.subr.mxu0 0.0
        %628 = vmatpush1.msra.mxu0 0.0
        %629 = vmatprep.mubr.f32.mxu0 0.0
        %630 = vmatmul.mubr.f32.gmra.mrb[0].mxu0 %v455
        %v631 = vpop.f32.mrb[0].mxu0
        %v632 = vadd.f32 0.0, %v631
        %v633 = vpop.f32.mrb[0].mxu0
        %634 = vmatprep.mubr.f32.mxu0 0.0
        %635 = vmatmul.mubr.f32.gmra.mrb[0].mxu0 %v458
        %v636 = vpop.f32.mrb[0].mxu0
        %v637 = vadd.f32 0.0, %v636
        %v638 = vpop.f32.mrb[0].mxu0
        %639 = vmatprep.mubr.f32.mxu0 0.0
        %640 = vmatmul.mubr.f32.gmra.mrb[0].mxu0 %v461
        %v641 = vpop.f32.mrb[0].mxu0
        %v642 = vadd.f32 0.0, %v641
        %v643 = vpop.f32.mrb[0].mxu0
        %644 = vmatprep.mubr.f32.mxu0 0.0
        %645 = vmatmul.mubr.f32.gmra.mrb[0].mxu0 %v464
        %v646 = vpop.f32.mrb[0].mxu0
        %v647 = vadd.f32 0.0, %v646
        %v648 = vpop.f32.mrb[0].mxu0
        %649 = vdwg.mxu0
        %v651 = vlaneseq
        %v652 = vshrl.u32 %v651, 7
        %v653 = vsub.s32 0, %v652
        %v654 = vrot.slane %v447, %v653
        %v655 = vlaneseq
        %v656 = vshrl.u32 %v655, 7
        %v657 = vsub.s32 1, %v656
        %v658 = vrot.slane %v447, %v657
        %v659 = vlaneseq
        %v660 = vshrl.u32 %v659, 7
        %v661 = vsub.s32 2, %v660
        %v662 = vrot.slane %v447, %v661
        %v666 = vmul.f32 %v543, %v654
        %v667 = vmul.f32 %v545, %v658
        %v668 = vmul.f32 %v632, %v662
        %v669 = vmul.f32 %v549, %v654
        %v670 = vmul.f32 %v551, %v658
        %v671 = vmul.f32 %v637, %v662
        %v672 = vmul.f32 %v555, %v654
        %v673 = vmul.f32 %v557, %v658
        %v674 = vmul.f32 %v642, %v662
        %v675 = vmul.f32 %v561, %v654
        %v676 = vmul.f32 %v563, %v658
        %v677 = vmul.f32 %v647, %v662
        %v678 = vld [vmem:[%s4] sm:$0xff]
        %v679 = vld [vmem:[%s4 + $0x8] sm:$0xff]
        %v680 = vld [vmem:[%s4 + $0x10] sm:$0xff]
        %v681 = vld [vmem:[%s4 + $0x18] sm:$0xff]
        %v682 = vld [vmem:[%s5] sm:$0xff]
        %v683 = vld [vmem:[%s5 + $0x8] sm:$0xff]
        %v684 = vld [vmem:[%s5 + $0x10] sm:$0xff]
        %v685 = vld [vmem:[%s5 + $0x18] sm:$0xff]
        %v686 = vadd.f32 %v666, %v669
        %v687 = vadd.f32 %v686, %v672
        %v688 = vadd.f32 %v687, %v675
        %v689 = vrot.slane %v688, 4
        %v690 = vadd.f32 %v688, %v689
        %v691 = vrot.slane %v690, 2
        %v692 = vadd.f32 %v690, %v691
        %v693 = vrot.slane %v692, 1
        %v694 = vadd.f32 %v692, %v693
        %v695 = vadd.f32 %v667, %v670
        %v696 = vadd.f32 %v695, %v673
        %v697 = vadd.f32 %v696, %v676
        %v698 = vrot.slane %v697, 4
        %v699 = vadd.f32 %v697, %v698
        %v700 = vrot.slane %v699, 2
        %v701 = vadd.f32 %v699, %v700
        %v702 = vrot.slane %v701, 1
        %v703 = vadd.f32 %v701, %v702
        %vm704 = vcmask 15360
        %v705 = vsel %vm704, %v668, 0.0
        %v706 = vsel %vm704, %v671, 0.0
        %v707 = vadd.f32 %v705, %v706
        %v708 = vsel %vm704, %v674, 0.0
        %v709 = vadd.f32 %v707, %v708
        %v710 = vsel %vm704, %v677, 0.0
        %v711 = vadd.f32 %v709, %v710
        %v712 = vrot.slane %v711, 4
        %v713 = vadd.f32 %v711, %v712
        %v714 = vrot.slane %v713, 2
        %v715 = vadd.f32 %v713, %v714
        %v716 = vrot.slane %v715, 1
        %v717 = vadd.f32 %v715, %v716
        %v718 = vmul.f32 %v694, 0.03125
        %v719 = vmul.f32 %v703, 0.03125
        %v720 = vmul.f32 %v717, 0.03125
        %v721 = vsub.f32 %v666, %v718
        %v722 = vsub.f32 %v667, %v719
        %v723 = vsub.f32 %v668, %v720
        %v724 = vsub.f32 %v669, %v718
        %v725 = vsub.f32 %v670, %v719
        %v726 = vsub.f32 %v671, %v720
        %v727 = vsub.f32 %v672, %v718
        %v728 = vsub.f32 %v673, %v719
        %v729 = vsub.f32 %v674, %v720
        %v730 = vsub.f32 %v675, %v718
        %v731 = vsub.f32 %v676, %v719
        %v732 = vsub.f32 %v677, %v720
        %v733 = vmul.f32 %v721, %v721
        %v734 = vmul.f32 %v722, %v722
        %v735 = vmul.f32 %v723, %v723
        %v736 = vmul.f32 %v724, %v724
        %v737 = vmul.f32 %v725, %v725
        %v738 = vmul.f32 %v726, %v726
        %v739 = vmul.f32 %v727, %v727
        %v740 = vmul.f32 %v728, %v728
        %v741 = vmul.f32 %v729, %v729
        %v742 = vmul.f32 %v730, %v730
        %v743 = vmul.f32 %v731, %v731
        %v744 = vmul.f32 %v732, %v732
        %v745 = vadd.f32 %v733, %v736
        %v746 = vadd.f32 %v745, %v739
        %v747 = vadd.f32 %v746, %v742
        %v748 = vrot.slane %v747, 4
        %v749 = vadd.f32 %v747, %v748
        %v750 = vrot.slane %v749, 2
        %v751 = vadd.f32 %v749, %v750
        %v752 = vrot.slane %v751, 1
        %v753 = vadd.f32 %v751, %v752
        %v754 = vadd.f32 %v734, %v737
        %v755 = vadd.f32 %v754, %v740
        %v756 = vadd.f32 %v755, %v743
        %v757 = vrot.slane %v756, 4
        %v758 = vadd.f32 %v756, %v757
        %v759 = vrot.slane %v758, 2
        %v760 = vadd.f32 %v758, %v759
        %v761 = vrot.slane %v760, 1
        %v762 = vadd.f32 %v760, %v761
        %v763 = vsel %vm704, %v735, 0.0
        %v764 = vsel %vm704, %v738, 0.0
        %v765 = vadd.f32 %v763, %v764
        %v766 = vsel %vm704, %v741, 0.0
        %v767 = vadd.f32 %v765, %v766
        %v768 = vsel %vm704, %v744, 0.0
        %v769 = vadd.f32 %v767, %v768
        %v770 = vrot.slane %v769, 4
        %v771 = vadd.f32 %v769, %v770
        %v772 = vrot.slane %v771, 2
        %v773 = vadd.f32 %v771, %v772
        %v774 = vrot.slane %v773, 1
        %v775 = vadd.f32 %v773, %v774
        %v776 = vmul.f32 %v753, 0.03125
        %v777 = vmul.f32 %v762, 0.03125
        %v778 = vmul.f32 %v775, 0.03125
        %v779 = vadd.f32 %v776, 1e-05
        %v780 = vadd.f32 %v777, 1e-05
        %v781 = vadd.f32 %v778, 1e-05
        %v782 = vrsqrt.pop %v779
        %v783 = vrsqrt.pop %v780
        %v784 = vrsqrt.pop %v781
        %v785 = vmul.f32 %v721, %v782
        %v786 = vmul.f32 %v722, %v783
        %v787 = vmul.f32 %v723, %v784
        %v788 = vmul.f32 %v724, %v782
        %v789 = vmul.f32 %v725, %v783
        %v790 = vmul.f32 %v726, %v784
        %v791 = vmul.f32 %v727, %v782
        %v792 = vmul.f32 %v728, %v783
        %v793 = vmul.f32 %v729, %v784
        %v794 = vmul.f32 %v730, %v782
        %v795 = vmul.f32 %v731, %v783
        %v796 = vmul.f32 %v732, %v784
        %798 = vset.pattern.permute.xlu0 0
        %799 = vperm.xlu0 %798, %v678
        %v800 = vpop.permute.xlu0 %799
        %803 = vset.pattern.permute.xlu0 0
        %804 = vperm.xlu0 %803, %v679
        %v805 = vpop.permute.xlu0 %804
        %808 = vset.pattern.permute.xlu0 0
        %809 = vperm.xlu0 %808, %v680
        %v810 = vpop.permute.xlu0 %809
        %813 = vset.pattern.permute.xlu0 0
        %814 = vperm.xlu0 %813, %v681
        %v815 = vpop.permute.xlu0 %814
        %v817 = vmul.f32 %v785, %v800
        %v818 = vmul.f32 %v786, %v800
        %v819 = vmul.f32 %v787, %v800
        %v820 = vmul.f32 %v788, %v805
        %v821 = vmul.f32 %v789, %v805
        %v822 = vmul.f32 %v790, %v805
        %v823 = vmul.f32 %v791, %v810
        %v824 = vmul.f32 %v792, %v810
        %v825 = vmul.f32 %v793, %v810
        %v826 = vmul.f32 %v794, %v815
        %v827 = vmul.f32 %v795, %v815
        %v828 = vmul.f32 %v796, %v815
        %830 = vset.pattern.permute.xlu0 0
        %831 = vperm.xlu0 %830, %v682
        %v832 = vpop.permute.xlu0 %831
        %835 = vset.pattern.permute.xlu0 0
        %836 = vperm.xlu0 %835, %v683
        %v837 = vpop.permute.xlu0 %836
        %840 = vset.pattern.permute.xlu0 0
        %841 = vperm.xlu0 %840, %v684
        %v842 = vpop.permute.xlu0 %841
        %845 = vset.pattern.permute.xlu0 0
        %846 = vperm.xlu0 %845, %v685
        %v847 = vpop.permute.xlu0 %846
        %v849 = vadd.f32 %v817, %v832
        %v850 = vadd.f32 %v818, %v832
        %v851 = vadd.f32 %v819, %v832
        %v852 = vadd.f32 %v820, %v837
        %v853 = vadd.f32 %v821, %v837
        %v854 = vadd.f32 %v822, %v837
        %v855 = vadd.f32 %v823, %v842
        %v856 = vadd.f32 %v824, %v842
        %v857 = vadd.f32 %v825, %v842
        %v858 = vadd.f32 %v826, %v847
        %v859 = vadd.f32 %v827, %v847
        %v860 = vadd.f32 %v828, %v847
        %v861 = vmax.f32 %v849, 0.0
        %v862 = vmax.f32 %v850, 0.0
        %v863 = vmax.f32 %v851, 0.0
        %v864 = vmax.f32 %v852, 0.0
        %v865 = vmax.f32 %v853, 0.0
        %v866 = vmax.f32 %v854, 0.0
        %v867 = vmax.f32 %v855, 0.0
        %v868 = vmax.f32 %v856, 0.0
        %v869 = vmax.f32 %v857, 0.0
        %v870 = vmax.f32 %v858, 0.0
        %v871 = vmax.f32 %v859, 0.0
        %v872 = vmax.f32 %v860, 0.0
        %v874 = vlaneseq
        %v875 = vshrl.u32 %v874, 7
        %v876 = vsub.s32 0, %v875
        %v877 = vrot.slane %v448, %v876
        %v878 = vlaneseq
        %v879 = vshrl.u32 %v878, 7
        %v880 = vsub.s32 1, %v879
        %v881 = vrot.slane %v448, %v880
        %v882 = vlaneseq
        %v883 = vshrl.u32 %v882, 7
        %v884 = vsub.s32 2, %v883
        %v885 = vrot.slane %v448, %v884
        %v889 = vmul.f32 %v861, %v877
        %v890 = vmul.f32 %v862, %v881
        %v891 = vmul.f32 %v863, %v885
        %v892 = vmul.f32 %v864, %v877
        %v893 = vmul.f32 %v865, %v881
        %v894 = vmul.f32 %v866, %v885
        %v895 = vmul.f32 %v867, %v877
        %v896 = vmul.f32 %v868, %v881
        %v897 = vmul.f32 %v869, %v885
        %v898 = vmul.f32 %v870, %v877
        %v899 = vmul.f32 %v871, %v881
        %v900 = vmul.f32 %v872, %v885
        %v901 = vld [vmem:[%s6] sm:$0xff]
        %v902 = vld [vmem:[%s6 + $0x8] sm:$0xff]
        %v903 = vld [vmem:[%s6 + $0x10] sm:$0xff]
        %v904 = vld [vmem:[%s6 + $0x18] sm:$0xff]
        %v905 = vld [vmem:[%s7] sm:$0xff]
        %v906 = vld [vmem:[%s7 + $0x8] sm:$0xff]
        %v907 = vld [vmem:[%s7 + $0x10] sm:$0xff]
        %v908 = vld [vmem:[%s7 + $0x18] sm:$0xff]
        %910 = vset.pattern.permute.xlu0 0
        %911 = vperm.xlu0 %910, %v905
        %v912 = vpop.permute.xlu0 %911
        %915 = vset.pattern.permute.xlu0 0
        %916 = vperm.xlu0 %915, %v906
        %v917 = vpop.permute.xlu0 %916
        %920 = vset.pattern.permute.xlu0 0
        %921 = vperm.xlu0 %920, %v907
        %v922 = vpop.permute.xlu0 %921
        %925 = vset.pattern.permute.xlu0 0
        %926 = vperm.xlu0 %925, %v908
        %v927 = vpop.permute.xlu0 %926
        %vm929 = vcmask 261120
        %v931 = vsel %vm929, %v901, 0
        %v934 = vsel %vm929, %v902, 0
        %v937 = vsel %vm929, %v903, 0
        %v940 = vsel %vm929, %v904, 0
        %942 = vmatprep.subr.mxu0 %v890
        %943 = vmatpush1.msra.mxu0 %v889
        %944 = vmatprep.subr.mxu0 %v893
        %945 = vmatpush1.msra.mxu0 %v892
        %946 = vmatprep.subr.mxu0 %v896
        %947 = vmatpush1.msra.mxu0 %v895
        %948 = vmatprep.subr.mxu0 %v899
        %949 = vmatpush1.msra.mxu0 %v898
        %950 = vmatprep.subr.mxu0 0.0
        %951 = vmatpush1.msra.mxu0 0.0
        %952 = vmatprep.subr.mxu0 0.0
        %953 = vmatpush1.msra.mxu0 0.0
        %954 = vmatprep.subr.mxu0 0.0
        %955 = vmatpush1.msra.mxu0 0.0
        %956 = vmatprep.subr.mxu0 0.0
        %957 = vmatpush1.msra.mxu0 0.0
        %958 = vmatprep.subr.mxu0 0.0
        %959 = vmatpush1.msra.mxu0 0.0
        %960 = vmatprep.subr.mxu0 0.0
        %961 = vmatpush1.msra.mxu0 0.0
        %962 = vmatprep.subr.mxu0 0.0
        %963 = vmatpush1.msra.mxu0 0.0
        %964 = vmatprep.subr.mxu0 0.0
        %965 = vmatpush1.msra.mxu0 0.0
        %966 = vmatprep.subr.mxu0 0.0
        %967 = vmatpush1.msra.mxu0 0.0
        %968 = vmatprep.subr.mxu0 0.0
        %969 = vmatpush1.msra.mxu0 0.0
        %970 = vmatprep.subr.mxu0 0.0
        %971 = vmatpush1.msra.mxu0 0.0
        %972 = vmatprep.subr.mxu0 0.0
        %973 = vmatpush1.msra.mxu0 0.0
        %974 = vmatprep.subr.mxu0 0.0
        %975 = vmatpush1.msra.mxu0 0.0
        %976 = vmatprep.subr.mxu0 0.0
        %977 = vmatpush1.msra.mxu0 0.0
        %978 = vmatprep.subr.mxu0 0.0
        %979 = vmatpush1.msra.mxu0 0.0
        %980 = vmatprep.subr.mxu0 0.0
        %981 = vmatpush1.msra.mxu0 0.0
        %982 = vmatprep.subr.mxu0 0.0
        %983 = vmatpush1.msra.mxu0 0.0
        %984 = vmatprep.subr.mxu0 0.0
        %985 = vmatpush1.msra.mxu0 0.0
        %986 = vmatprep.subr.mxu0 0.0
        %987 = vmatpush1.msra.mxu0 0.0
        %988 = vmatprep.subr.mxu0 0.0
        %989 = vmatpush1.msra.mxu0 0.0
        %990 = vmatprep.subr.mxu0 0.0
        %991 = vmatpush1.msra.mxu0 0.0
        %992 = vmatprep.subr.mxu0 0.0
        %993 = vmatpush1.msra.mxu0 0.0
        %994 = vmatprep.subr.mxu0 0.0
        %995 = vmatpush1.msra.mxu0 0.0
        %996 = vmatprep.subr.mxu0 0.0
        %997 = vmatpush1.msra.mxu0 0.0
        %998 = vmatprep.subr.mxu0 0.0
        %999 = vmatpush1.msra.mxu0 0.0
        %1000 = vmatprep.subr.mxu0 0.0
        %1001 = vmatpush1.msra.mxu0 0.0
        %1002 = vmatprep.subr.mxu0 0.0
        %1003 = vmatpush1.msra.mxu0 0.0
        %1004 = vmatprep.subr.mxu0 0.0
        %1005 = vmatpush1.msra.mxu0 0.0
        %1006 = vmatprep.mubr.f32.mxu0 0.0
        %1007 = vmatmul.mubr.f32.gmra.mrb[0].mxu0 %v931
        %v1008 = vpop.f32.mrb[0].mxu0
        %v1009 = vadd.f32 %v912, %v1008
        %v1010 = vpop.f32.mrb[0].mxu0
        %v1011 = vadd.f32 %v912, %v1010
        %1012 = vmatprep.mubr.f32.mxu0 0.0
        %1013 = vmatmul.mubr.f32.gmra.mrb[0].mxu0 %v934
        %v1014 = vpop.f32.mrb[0].mxu0
        %v1015 = vadd.f32 %v917, %v1014
        %v1016 = vpop.f32.mrb[0].mxu0
        %v1017 = vadd.f32 %v917, %v1016
        %1018 = vmatprep.mubr.f32.mxu0 0.0
        %1019 = vmatmul.mubr.f32.gmra.mrb[0].mxu0 %v937
        %v1020 = vpop.f32.mrb[0].mxu0
        %v1021 = vadd.f32 %v922, %v1020
        %v1022 = vpop.f32.mrb[0].mxu0
        %v1023 = vadd.f32 %v922, %v1022
        %1024 = vmatprep.mubr.f32.mxu0 0.0
        %1025 = vmatmul.mubr.f32.gmra.mrb[0].mxu0 %v940
        %v1026 = vpop.f32.mrb[0].mxu0
        %v1027 = vadd.f32 %v927, %v1026
        %v1028 = vpop.f32.mrb[0].mxu0
        %v1029 = vadd.f32 %v927, %v1028
        %1030 = vdwg.mxu0
        %s1031 = scalar_lea.vmem %s6, 32
        %v1032 = vld [vmem:[%s1031] sm:$0xff]
        %v1033 = vld [vmem:[%s1031 + $0x8] sm:$0xff]
        %v1034 = vld [vmem:[%s1031 + $0x10] sm:$0xff]
        %v1035 = vld [vmem:[%s1031 + $0x18] sm:$0xff]
        %1048 = vrot.lane.b32.xlu0 %v889, 127
        %v1049 = vpop.permute.xlu0 %1048
        %1050 = vrot.lane.b32.xlu0 %v890, 127
        %v1051 = vpop.permute.xlu0 %1050
        %1052 = vrot.lane.b32.xlu0 %v891, 127
        %v1053 = vpop.permute.xlu0 %1052
        %1054 = vrot.lane.b32.xlu0 %v892, 127
        %v1055 = vpop.permute.xlu0 %1054
        %1056 = vrot.lane.b32.xlu0 %v893, 127
        %v1057 = vpop.permute.xlu0 %1056
        %1058 = vrot.lane.b32.xlu0 %v894, 127
        %v1059 = vpop.permute.xlu0 %1058
        %1060 = vrot.lane.b32.xlu0 %v895, 127
        %v1061 = vpop.permute.xlu0 %1060
        %1062 = vrot.lane.b32.xlu0 %v896, 127
        %v1063 = vpop.permute.xlu0 %1062
        %1064 = vrot.lane.b32.xlu0 %v897, 127
        %v1065 = vpop.permute.xlu0 %1064
        %1066 = vrot.lane.b32.xlu0 %v898, 127
        %v1067 = vpop.permute.xlu0 %1066
        %1068 = vrot.lane.b32.xlu0 %v899, 127
        %v1069 = vpop.permute.xlu0 %1068
        %1070 = vrot.lane.b32.xlu0 %v900, 127
        %v1071 = vpop.permute.xlu0 %1070
        %vm1072 = vcmask 1039360
        %v1073 = vsel %vm1072, %v1049, %v1051
        %v1074 = vsel %vm1072, %v1051, %v1053
        %v1075 = vsel %vm1072, %v1055, %v1057
        %v1076 = vsel %vm1072, %v1057, %v1059
        %v1077 = vsel %vm1072, %v1061, %v1063
        %v1078 = vsel %vm1072, %v1063, %v1065
        %v1079 = vsel %vm1072, %v1067, %v1069
        %v1080 = vsel %vm1072, %v1069, %v1071
        %v1090 = vsel %vm929, %v1032, 0
        %v1093 = vsel %vm929, %v1033, 0
        %v1096 = vsel %vm929, %v1034, 0
        %v1099 = vsel %vm929, %v1035, 0
        %1101 = vmatprep.subr.mxu0 %v1074
        %1102 = vmatpush1.msra.mxu0 %v1073
        %1103 = vmatprep.subr.mxu0 %v1076
        %1104 = vmatpush1.msra.mxu0 %v1075
        %1105 = vmatprep.subr.mxu0 %v1078
        %1106 = vmatpush1.msra.mxu0 %v1077
        %1107 = vmatprep.subr.mxu0 %v1080
        %1108 = vmatpush1.msra.mxu0 %v1079
        %1109 = vmatprep.subr.mxu0 0.0
        %1110 = vmatpush1.msra.mxu0 0.0
        %1111 = vmatprep.subr.mxu0 0.0
        %1112 = vmatpush1.msra.mxu0 0.0
        %1113 = vmatprep.subr.mxu0 0.0
        %1114 = vmatpush1.msra.mxu0 0.0
        %1115 = vmatprep.subr.mxu0 0.0
        %1116 = vmatpush1.msra.mxu0 0.0
        %1117 = vmatprep.subr.mxu0 0.0
        %1118 = vmatpush1.msra.mxu0 0.0
        %1119 = vmatprep.subr.mxu0 0.0
        %1120 = vmatpush1.msra.mxu0 0.0
        %1121 = vmatprep.subr.mxu0 0.0
        %1122 = vmatpush1.msra.mxu0 0.0
        %1123 = vmatprep.subr.mxu0 0.0
        %1124 = vmatpush1.msra.mxu0 0.0
        %1125 = vmatprep.subr.mxu0 0.0
        %1126 = vmatpush1.msra.mxu0 0.0
        %1127 = vmatprep.subr.mxu0 0.0
        %1128 = vmatpush1.msra.mxu0 0.0
        %1129 = vmatprep.subr.mxu0 0.0
        %1130 = vmatpush1.msra.mxu0 0.0
        %1131 = vmatprep.subr.mxu0 0.0
        %1132 = vmatpush1.msra.mxu0 0.0
        %1133 = vmatprep.subr.mxu0 0.0
        %1134 = vmatpush1.msra.mxu0 0.0
        %1135 = vmatprep.subr.mxu0 0.0
        %1136 = vmatpush1.msra.mxu0 0.0
        %1137 = vmatprep.subr.mxu0 0.0
        %1138 = vmatpush1.msra.mxu0 0.0
        %1139 = vmatprep.subr.mxu0 0.0
        %1140 = vmatpush1.msra.mxu0 0.0
        %1141 = vmatprep.subr.mxu0 0.0
        %1142 = vmatpush1.msra.mxu0 0.0
        %1143 = vmatprep.subr.mxu0 0.0
        %1144 = vmatpush1.msra.mxu0 0.0
        %1145 = vmatprep.subr.mxu0 0.0
        %1146 = vmatpush1.msra.mxu0 0.0
        %1147 = vmatprep.subr.mxu0 0.0
        %1148 = vmatpush1.msra.mxu0 0.0
        %1149 = vmatprep.subr.mxu0 0.0
        %1150 = vmatpush1.msra.mxu0 0.0
        %1151 = vmatprep.subr.mxu0 0.0
        %1152 = vmatpush1.msra.mxu0 0.0
        %1153 = vmatprep.subr.mxu0 0.0
        %1154 = vmatpush1.msra.mxu0 0.0
        %1155 = vmatprep.subr.mxu0 0.0
        %1156 = vmatpush1.msra.mxu0 0.0
        %1157 = vmatprep.subr.mxu0 0.0
        %1158 = vmatpush1.msra.mxu0 0.0
        %1159 = vmatprep.subr.mxu0 0.0
        %1160 = vmatpush1.msra.mxu0 0.0
        %1161 = vmatprep.subr.mxu0 0.0
        %1162 = vmatpush1.msra.mxu0 0.0
        %1163 = vmatprep.subr.mxu0 0.0
        %1164 = vmatpush1.msra.mxu0 0.0
        %1165 = vmatprep.mubr.f32.mxu0 0.0
        %1166 = vmatmul.mubr.f32.gmra.mrb[0].mxu0 %v1090
        %v1167 = vpop.f32.mrb[0].mxu0
        %v1168 = vadd.f32 0.0, %v1167
        %v1169 = vpop.f32.mrb[0].mxu0
        %v1170 = vadd.f32 0.0, %v1169
        %1171 = vmatprep.mubr.f32.mxu0 0.0
        %1172 = vmatmul.mubr.f32.gmra.mrb[0].mxu0 %v1093
        %v1173 = vpop.f32.mrb[0].mxu0
        %v1174 = vadd.f32 0.0, %v1173
        %v1175 = vpop.f32.mrb[0].mxu0
        %v1176 = vadd.f32 0.0, %v1175
        %1177 = vmatprep.mubr.f32.mxu0 0.0
        %1178 = vmatmul.mubr.f32.gmra.mrb[0].mxu0 %v1096
        %v1179 = vpop.f32.mrb[0].mxu0
        %v1180 = vadd.f32 0.0, %v1179
        %v1181 = vpop.f32.mrb[0].mxu0
        %v1182 = vadd.f32 0.0, %v1181
        %1183 = vmatprep.mubr.f32.mxu0 0.0
        %1184 = vmatmul.mubr.f32.gmra.mrb[0].mxu0 %v1099
        %v1185 = vpop.f32.mrb[0].mxu0
        %v1186 = vadd.f32 0.0, %v1185
        %v1187 = vpop.f32.mrb[0].mxu0
        %v1188 = vadd.f32 0.0, %v1187
        %1189 = vdwg.mxu0
        %v1190 = vadd.f32 %v1009, %v1168
        %v1191 = vadd.f32 %v1011, %v1170
        %v1192 = vadd.f32 %v1015, %v1174
        %v1193 = vadd.f32 %v1017, %v1176
        %v1194 = vadd.f32 %v1021, %v1180
        %v1195 = vadd.f32 %v1023, %v1182
        %v1196 = vadd.f32 %v1027, %v1186
        %v1197 = vadd.f32 %v1029, %v1188
        %s1198 = scalar_lea.vmem %s6, 64
        %v1199 = vld [vmem:[%s1198] sm:$0xff]
        %v1200 = vld [vmem:[%s1198 + $0x8] sm:$0xff]
        %v1201 = vld [vmem:[%s1198 + $0x10] sm:$0xff]
        %v1202 = vld [vmem:[%s1198 + $0x18] sm:$0xff]
        %1203 = vrot.lane.b32.xlu0 %v889, 126
        %v1204 = vpop.permute.xlu0 %1203
        %1205 = vrot.lane.b32.xlu0 %v890, 126
        %v1206 = vpop.permute.xlu0 %1205
        %1207 = vrot.lane.b32.xlu0 %v891, 126
        %v1208 = vpop.permute.xlu0 %1207
        %1209 = vrot.lane.b32.xlu0 %v892, 126
        %v1210 = vpop.permute.xlu0 %1209
        %1211 = vrot.lane.b32.xlu0 %v893, 126
        %v1212 = vpop.permute.xlu0 %1211
        %1213 = vrot.lane.b32.xlu0 %v894, 126
        %v1214 = vpop.permute.xlu0 %1213
        %1215 = vrot.lane.b32.xlu0 %v895, 126
        %v1216 = vpop.permute.xlu0 %1215
        %1217 = vrot.lane.b32.xlu0 %v896, 126
        %v1218 = vpop.permute.xlu0 %1217
        %1219 = vrot.lane.b32.xlu0 %v897, 126
        %v1220 = vpop.permute.xlu0 %1219
        %1221 = vrot.lane.b32.xlu0 %v898, 126
        %v1222 = vpop.permute.xlu0 %1221
        %1223 = vrot.lane.b32.xlu0 %v899, 126
        %v1224 = vpop.permute.xlu0 %1223
        %1225 = vrot.lane.b32.xlu0 %v900, 126
        %v1226 = vpop.permute.xlu0 %1225
        %vm1227 = vcmask 1031168
        %v1228 = vsel %vm1227, %v1204, %v1206
        %v1229 = vsel %vm1227, %v1206, %v1208
        %v1230 = vsel %vm1227, %v1210, %v1212
        %v1231 = vsel %vm1227, %v1212, %v1214
        %v1232 = vsel %vm1227, %v1216, %v1218
        %v1233 = vsel %vm1227, %v1218, %v1220
        %v1234 = vsel %vm1227, %v1222, %v1224
        %v1235 = vsel %vm1227, %v1224, %v1226
        %v1245 = vsel %vm929, %v1199, 0
        %v1248 = vsel %vm929, %v1200, 0
        %v1251 = vsel %vm929, %v1201, 0
        %v1254 = vsel %vm929, %v1202, 0
        %1256 = vmatprep.subr.mxu0 %v1229
        %1257 = vmatpush1.msra.mxu0 %v1228
        %1258 = vmatprep.subr.mxu0 %v1231
        %1259 = vmatpush1.msra.mxu0 %v1230
        %1260 = vmatprep.subr.mxu0 %v1233
        %1261 = vmatpush1.msra.mxu0 %v1232
        %1262 = vmatprep.subr.mxu0 %v1235
        %1263 = vmatpush1.msra.mxu0 %v1234
        %1264 = vmatprep.subr.mxu0 0.0
        %1265 = vmatpush1.msra.mxu0 0.0
        %1266 = vmatprep.subr.mxu0 0.0
        %1267 = vmatpush1.msra.mxu0 0.0
        %1268 = vmatprep.subr.mxu0 0.0
        %1269 = vmatpush1.msra.mxu0 0.0
        %1270 = vmatprep.subr.mxu0 0.0
        %1271 = vmatpush1.msra.mxu0 0.0
        %1272 = vmatprep.subr.mxu0 0.0
        %1273 = vmatpush1.msra.mxu0 0.0
        %1274 = vmatprep.subr.mxu0 0.0
        %1275 = vmatpush1.msra.mxu0 0.0
        %1276 = vmatprep.subr.mxu0 0.0
        %1277 = vmatpush1.msra.mxu0 0.0
        %1278 = vmatprep.subr.mxu0 0.0
        %1279 = vmatpush1.msra.mxu0 0.0
        %1280 = vmatprep.subr.mxu0 0.0
        %1281 = vmatpush1.msra.mxu0 0.0
        %1282 = vmatprep.subr.mxu0 0.0
        %1283 = vmatpush1.msra.mxu0 0.0
        %1284 = vmatprep.subr.mxu0 0.0
        %1285 = vmatpush1.msra.mxu0 0.0
        %1286 = vmatprep.subr.mxu0 0.0
        %1287 = vmatpush1.msra.mxu0 0.0
        %1288 = vmatprep.subr.mxu0 0.0
        %1289 = vmatpush1.msra.mxu0 0.0
        %1290 = vmatprep.subr.mxu0 0.0
        %1291 = vmatpush1.msra.mxu0 0.0
        %1292 = vmatprep.subr.mxu0 0.0
        %1293 = vmatpush1.msra.mxu0 0.0
        %1294 = vmatprep.subr.mxu0 0.0
        %1295 = vmatpush1.msra.mxu0 0.0
        %1296 = vmatprep.subr.mxu0 0.0
        %1297 = vmatpush1.msra.mxu0 0.0
        %1298 = vmatprep.subr.mxu0 0.0
        %1299 = vmatpush1.msra.mxu0 0.0
        %1300 = vmatprep.subr.mxu0 0.0
        %1301 = vmatpush1.msra.mxu0 0.0
        %1302 = vmatprep.subr.mxu0 0.0
        %1303 = vmatpush1.msra.mxu0 0.0
        %1304 = vmatprep.subr.mxu0 0.0
        %1305 = vmatpush1.msra.mxu0 0.0
        %1306 = vmatprep.subr.mxu0 0.0
        %1307 = vmatpush1.msra.mxu0 0.0
        %1308 = vmatprep.subr.mxu0 0.0
        %1309 = vmatpush1.msra.mxu0 0.0
        %1310 = vmatprep.subr.mxu0 0.0
        %1311 = vmatpush1.msra.mxu0 0.0
        %1312 = vmatprep.subr.mxu0 0.0
        %1313 = vmatpush1.msra.mxu0 0.0
        %1314 = vmatprep.subr.mxu0 0.0
        %1315 = vmatpush1.msra.mxu0 0.0
        %1316 = vmatprep.subr.mxu0 0.0
        %1317 = vmatpush1.msra.mxu0 0.0
        %1318 = vmatprep.subr.mxu0 0.0
        %1319 = vmatpush1.msra.mxu0 0.0
        %1320 = vmatprep.mubr.f32.mxu0 0.0
        %1321 = vmatmul.mubr.f32.gmra.mrb[0].mxu0 %v1245
        %v1322 = vpop.f32.mrb[0].mxu0
        %v1323 = vadd.f32 0.0, %v1322
        %v1324 = vpop.f32.mrb[0].mxu0
        %v1325 = vadd.f32 0.0, %v1324
        %1326 = vmatprep.mubr.f32.mxu0 0.0
        %1327 = vmatmul.mubr.f32.gmra.mrb[0].mxu0 %v1248
        %v1328 = vpop.f32.mrb[0].mxu0
        %v1329 = vadd.f32 0.0, %v1328
        %v1330 = vpop.f32.mrb[0].mxu0
        %v1331 = vadd.f32 0.0, %v1330
        %1332 = vmatprep.mubr.f32.mxu0 0.0
        %1333 = vmatmul.mubr.f32.gmra.mrb[0].mxu0 %v1251
        %v1334 = vpop.f32.mrb[0].mxu0
        %v1335 = vadd.f32 0.0, %v1334
        %v1336 = vpop.f32.mrb[0].mxu0
        %v1337 = vadd.f32 0.0, %v1336
        %1338 = vmatprep.mubr.f32.mxu0 0.0
        %1339 = vmatmul.mubr.f32.gmra.mrb[0].mxu0 %v1254
        %v1340 = vpop.f32.mrb[0].mxu0
        %v1341 = vadd.f32 0.0, %v1340
        %v1342 = vpop.f32.mrb[0].mxu0
        %v1343 = vadd.f32 0.0, %v1342
        %1344 = vdwg.mxu0
        %v1345 = vadd.f32 %v1190, %v1323
        %v1346 = vadd.f32 %v1191, %v1325
        %v1347 = vadd.f32 %v1192, %v1329
        %v1348 = vadd.f32 %v1193, %v1331
        %v1349 = vadd.f32 %v1194, %v1335
        %v1350 = vadd.f32 %v1195, %v1337
        %v1351 = vadd.f32 %v1196, %v1341
        %v1352 = vadd.f32 %v1197, %v1343
        %1353 = vrot.lane.b32.xlu0 %v654, 127
        %v1354 = vpop.permute.xlu0 %1353
        %1355 = vrot.lane.b32.xlu0 %v658, 127
        %v1356 = vpop.permute.xlu0 %1355
        %1357 = vrot.lane.b32.xlu0 %v662, 127
        %v1358 = vpop.permute.xlu0 %1357
        %v1359 = vsel %vm1072, %v1354, %v1356
        %v1360 = vsel %vm1072, %v1356, %v1358
        %v1363 = vmul.f32 %v1345, %v1359
        %v1364 = vmul.f32 %v1346, %v1360
        %v1365 = vmul.f32 %v1347, %v1359
        %v1366 = vmul.f32 %v1348, %v1360
        %v1367 = vmul.f32 %v1349, %v1359
        %v1368 = vmul.f32 %v1350, %v1360
        %v1369 = vmul.f32 %v1351, %v1359
        %v1370 = vmul.f32 %v1352, %v1360
        %v1371 = vld [vmem:[%s8] sm:$0xff]
        %v1372 = vld [vmem:[%s8 + $0x8] sm:$0xff]
        %v1373 = vld [vmem:[%s8 + $0x10] sm:$0xff]
        %v1374 = vld [vmem:[%s8 + $0x18] sm:$0xff]
        %v1375 = vld [vmem:[%s9] sm:$0xff]
        %v1376 = vld [vmem:[%s9 + $0x8] sm:$0xff]
        %v1377 = vld [vmem:[%s9 + $0x10] sm:$0xff]
        %v1378 = vld [vmem:[%s9 + $0x18] sm:$0xff]
        %v1379 = vadd.f32 %v1363, %v1365
        %v1380 = vadd.f32 %v1379, %v1367
        %v1381 = vadd.f32 %v1380, %v1369
        %v1382 = vrot.slane %v1381, 4
        %v1383 = vadd.f32 %v1381, %v1382
        %v1384 = vrot.slane %v1383, 2
        %v1385 = vadd.f32 %v1383, %v1384
        %v1386 = vrot.slane %v1385, 1
        %v1387 = vadd.f32 %v1385, %v1386
        %v1388 = vadd.f32 %v1364, %v1366
        %v1389 = vadd.f32 %v1388, %v1368
        %v1390 = vadd.f32 %v1389, %v1370
        %v1391 = vrot.slane %v1390, 4
        %v1392 = vadd.f32 %v1390, %v1391
        %v1393 = vrot.slane %v1392, 2
        %v1394 = vadd.f32 %v1392, %v1393
        %v1395 = vrot.slane %v1394, 1
        %v1396 = vadd.f32 %v1394, %v1395
        %v1397 = vmul.f32 %v1387, 0.03125
        %v1398 = vmul.f32 %v1396, 0.03125
        %v1399 = vsub.f32 %v1363, %v1397
        %v1400 = vsub.f32 %v1364, %v1398
        %v1401 = vsub.f32 %v1365, %v1397
        %v1402 = vsub.f32 %v1366, %v1398
        %v1403 = vsub.f32 %v1367, %v1397
        %v1404 = vsub.f32 %v1368, %v1398
        %v1405 = vsub.f32 %v1369, %v1397
        %v1406 = vsub.f32 %v1370, %v1398
        %v1407 = vmul.f32 %v1399, %v1399
        %v1408 = vmul.f32 %v1400, %v1400
        %v1409 = vmul.f32 %v1401, %v1401
        %v1410 = vmul.f32 %v1402, %v1402
        %v1411 = vmul.f32 %v1403, %v1403
        %v1412 = vmul.f32 %v1404, %v1404
        %v1413 = vmul.f32 %v1405, %v1405
        %v1414 = vmul.f32 %v1406, %v1406
        %v1415 = vadd.f32 %v1407, %v1409
        %v1416 = vadd.f32 %v1415, %v1411
        %v1417 = vadd.f32 %v1416, %v1413
        %v1418 = vrot.slane %v1417, 4
        %v1419 = vadd.f32 %v1417, %v1418
        %v1420 = vrot.slane %v1419, 2
        %v1421 = vadd.f32 %v1419, %v1420
        %v1422 = vrot.slane %v1421, 1
        %v1423 = vadd.f32 %v1421, %v1422
        %v1424 = vadd.f32 %v1408, %v1410
        %v1425 = vadd.f32 %v1424, %v1412
        %v1426 = vadd.f32 %v1425, %v1414
        %v1427 = vrot.slane %v1426, 4
        %v1428 = vadd.f32 %v1426, %v1427
        %v1429 = vrot.slane %v1428, 2
        %v1430 = vadd.f32 %v1428, %v1429
        %v1431 = vrot.slane %v1430, 1
        %v1432 = vadd.f32 %v1430, %v1431
        %v1433 = vmul.f32 %v1423, 0.03125
        %v1434 = vmul.f32 %v1432, 0.03125
        %v1435 = vadd.f32 %v1433, 1e-05
        %v1436 = vadd.f32 %v1434, 1e-05
        %v1437 = vrsqrt.pop %v1435
        %v1438 = vrsqrt.pop %v1436
        %v1439 = vmul.f32 %v1399, %v1437
        %v1440 = vmul.f32 %v1400, %v1438
        %v1441 = vmul.f32 %v1401, %v1437
        %v1442 = vmul.f32 %v1402, %v1438
        %v1443 = vmul.f32 %v1403, %v1437
        %v1444 = vmul.f32 %v1404, %v1438
        %v1445 = vmul.f32 %v1405, %v1437
        %v1446 = vmul.f32 %v1406, %v1438
        %1448 = vset.pattern.permute.xlu0 0
        %1449 = vperm.xlu0 %1448, %v1371
        %v1450 = vpop.permute.xlu0 %1449
        %1453 = vset.pattern.permute.xlu0 0
        %1454 = vperm.xlu0 %1453, %v1372
        %v1455 = vpop.permute.xlu0 %1454
        %1458 = vset.pattern.permute.xlu0 0
        %1459 = vperm.xlu0 %1458, %v1373
        %v1460 = vpop.permute.xlu0 %1459
        %1463 = vset.pattern.permute.xlu0 0
        %1464 = vperm.xlu0 %1463, %v1374
        %v1465 = vpop.permute.xlu0 %1464
        %v1467 = vmul.f32 %v1439, %v1450
        %v1468 = vmul.f32 %v1440, %v1450
        %v1469 = vmul.f32 %v1441, %v1455
        %v1470 = vmul.f32 %v1442, %v1455
        %v1471 = vmul.f32 %v1443, %v1460
        %v1472 = vmul.f32 %v1444, %v1460
        %v1473 = vmul.f32 %v1445, %v1465
        %v1474 = vmul.f32 %v1446, %v1465
        %1476 = vset.pattern.permute.xlu0 0
        %1477 = vperm.xlu0 %1476, %v1375
        %v1478 = vpop.permute.xlu0 %1477
        %1481 = vset.pattern.permute.xlu0 0
        %1482 = vperm.xlu0 %1481, %v1376
        %v1483 = vpop.permute.xlu0 %1482
        %1486 = vset.pattern.permute.xlu0 0
        %1487 = vperm.xlu0 %1486, %v1377
        %v1488 = vpop.permute.xlu0 %1487
        %1491 = vset.pattern.permute.xlu0 0
        %1492 = vperm.xlu0 %1491, %v1378
        %v1493 = vpop.permute.xlu0 %1492
        %v1495 = vadd.f32 %v1467, %v1478
        %v1496 = vadd.f32 %v1468, %v1478
        %v1497 = vadd.f32 %v1469, %v1483
        %v1498 = vadd.f32 %v1470, %v1483
        %v1499 = vadd.f32 %v1471, %v1488
        %v1500 = vadd.f32 %v1472, %v1488
        %v1501 = vadd.f32 %v1473, %v1493
        %v1502 = vadd.f32 %v1474, %v1493
        %v1503 = vmax.f32 %v1495, 0.0
        %v1504 = vmax.f32 %v1496, 0.0
        %v1505 = vmax.f32 %v1497, 0.0
        %v1506 = vmax.f32 %v1498, 0.0
        %v1507 = vmax.f32 %v1499, 0.0
        %v1508 = vmax.f32 %v1500, 0.0
        %v1509 = vmax.f32 %v1501, 0.0
        %v1510 = vmax.f32 %v1502, 0.0
        %1511 = vst [vmem:[%s412] sm:$0xff] %v1503
        %1512 = vst [vmem:[%s412 + $0x8] sm:$0xff] %v1504
        %1513 = vst [vmem:[%s412 + $0x10] sm:$0xff] %v1505
        %1514 = vst [vmem:[%s412 + $0x18] sm:$0xff] %v1506
        %1515 = vst [vmem:[%s412 + $0x20] sm:$0xff] %v1507
        %1516 = vst [vmem:[%s412 + $0x28] sm:$0xff] %v1508
        %1517 = vst [vmem:[%s412 + $0x30] sm:$0xff] %v1509
        %1518 = vst [vmem:[%s412 + $0x38] sm:$0xff] %v1510
        %s1519 = sand.u32 %s275, 1
        %s1520 = scalar_lea.sflag [#allocation3], %s1519
        %s1521 = sand.u32 %s275, 1
        %s1522 = smul.addr %s1521, 64
        %s1523 = scalar_lea.vmem [#allocation2], %s1522
        // Predicated region
        $region61: #{embedding_module.1} parent=59 // pred_check
          %p1524 = pneg %p285
        $region62: #{embedding_module.1} parent=59 // pred_check_branch
          %1526 = sbr.rel (%p1524) target = $region64
        $region63: #{embedding_module.1} parent=59 // pred_region
          %s1527 = smul.u32 2, %s29
          %s1529 = ssub.s32 1024, 1024
          %1530 = vsyncadd %s1520, %s1529
          %s1531 = smul.addr %s28, 8
          %s1532 = sadd.s32 %s1527, %s1531
          %s1533 = smul.addr %s1532, 128
          %s1534 = scalar_lea.hbm %s10, %s1533
          %s1535 = sshll.u32 %s1523, 4
          %s1536 = int_to_ptr.vmem [resolvable:$true] %s1535
          %1541 = dma.vmem_to_hbm [thread:$0]  %s1536, 1024, %s1534, %s1520, 256, 256, 16
        $region64: #{embedding_module.1} parent=59 // pred_fallthru
          _
      $region60: #{embedding_module.1} parent=5 // pred_fallthru
        _
      %p1542 = scmp.le.s32.totalorder 2, %s19
      // Predicated region
      $region65: #{embedding_module.1} parent=5 // pred_check
        %p1543 = pneg %p1542
      $region66: #{embedding_module.1} parent=5 // pred_check_branch
        %1545 = sbr.rel (%p1543) target = $region68
      $region67: #{embedding_module.1} parent=5 // pred_region
        %s1546 = ssub.s32 %s19, 2
        // Predicated region
        $region69: #{embedding_module.1} parent=67 // pred_check
          %p1547 = pneg %p291
        $region70: #{embedding_module.1} parent=67 // pred_check_branch
          %1549 = sbr.rel (%p1547) target = $region72
        $region71: #{embedding_module.1} parent=67 // pred_region
          %s1550 = sand.u32 %s276, 1
          %s1551 = scalar_lea.sflag [#allocation3], %s1550
          %s1552 = sand.u32 %s276, 1
          %s1553 = smul.addr %s1552, 64
          %s1554 = scalar_lea.vmem [#allocation2], %s1553
          %1555 = dma.done %s1551, 1024
        $region72: #{embedding_module.1} parent=67 // pred_fallthru
          _
      $region68: #{embedding_module.1} parent=5 // pred_fallthru
        _
    $region6: #{embedding_module.1} parent=1 // loop_footer
      %s23 = sadd.s32 1, %s19
    $region7: #{embedding_module.1} parent=1 // loop_footer_branch
      %18 = sbr.rel target = $region3
    $region8: #{embedding_module.1} parent=1 // loop_exit
      _
    %1556 = vsyncpa [#allocation3], 1
    %s1557 = scalar_lea.sflag [#allocation3], 1
    %1558 = vsyncpa %s1557, 1

</llo_original>
